<compile_context>
chip_gen: v6e
topology: v6e:2x2x1
jax: 0.10.0
libtpu: 0.0.40
codegen_flags: <defaults>
</compile_context>

<pallas_src>
import functools
import math

import jax
import jax.numpy as jnp
from jax import lax
from jax.experimental import pallas as pl
from jax.experimental.pallas import tpu as pltpu

EPS = 1e-6
COMPUTE_DTYPE = jnp.bfloat16   # MXU operand dtype; stats/accums stay f32


# ----------------------------- VMEM limit (per generation) -------------------
@functools.lru_cache(maxsize=None)
def _default_vmem_limit():
    cap = 0
    try:
        info = pltpu.get_tpu_info()
        cap = int(getattr(info, "vmem_capacity_bytes", 0))
    except Exception:
        cap = 0
    if cap < (32 << 20):           # unknown / implausible -> conservative
        cap = 64 << 20             # works on v7x (64 MiB) and larger parts
    # leave headroom for the compiler; ~48 MiB on v7x, ~96-100 MiB on v5e/v6e
    return min((cap * 3) // 4, 100 << 20)


def _pick_tile(n, candidates):
    for t in candidates:
        if t <= n and n % t == 0:
            return t
    return n


# ----------------------------- in-kernel helpers -----------------------------
def _layernorm_f32(x, gamma, beta):
    """LayerNorm over the last axis; statistics in f32. Returns f32 (R, E)."""
    xf = x.astype(jnp.float32)
    mean = jnp.mean(xf, axis=-1, keepdims=True)
    var = jnp.mean((xf - mean) ** 2, axis=-1, keepdims=True)  # biased, as torch
    return (xf - mean) * lax.rsqrt(var + EPS) * gamma + beta


# ----------------------------- attention block kernel ------------------------
def _attn_block_kernel(xq_ref, xkv_ref, g_ref, b_ref, wq_ref, bq_ref,
                       wkv_ref, bkv_ref, wo_ref, bo_ref, mask_ref, o_ref,
                       q_sc, kv_sc, m_sc, l_sc, acc_sc, ctx_sc,
                       *, num_heads, norm_kv):
    """One grid step = (batch b, q tile qi, kv tile ki) of a fused pre-LN MHA.

    xq_ref:  (1, tq, E)  query-side residual-stream tile
    xkv_ref: (1, tk, E)  key/value source tile (x itself or enc_out)
    mask:    (1, tq, tk) int8 (nonzero = keep)
    scratch: q_sc (tq,E) bf16, kv_sc (nk,tk,2E) bf16,
             m/l (H,tq,1) f32, acc (H,tq,Dh) f32, ctx (tq,E) f32
    """
    qi = pl.program_id(1)
    ki = pl.program_id(2)
    nk = pl.num_programs(2)
    E = xq_ref.shape[-1]
    H = num_heads
    dh = E // H
    scale = 1.0 / math.sqrt(dh)
    cdt = q_sc.dtype

    # --- K/V projection for this kv tile: once per batch element (qi == 0) ---
    @pl.when(qi == 0)
    def _():
        src = xkv_ref[0]                                        # (tk, E)
        if norm_kv:   # self-attention: K/V come from LN(x); cross: raw enc_out
            src = _layernorm_f32(src, g_ref[...], b_ref[...])
        src = src.astype(cdt)
        kv_sc[ki] = (jnp.dot(src, wkv_ref[...],
                             preferred_element_type=jnp.float32)
                     + bkv_ref[...]).astype(cdt)                # (tk, 2E)

    # --- Q projection + online-softmax state init: once per q tile (ki == 0) -
    @pl.when(ki == 0)
    def _():
        nq = _layernorm_f32(xq_ref[0], g_ref[...], b_ref[...]).astype(cdt)
        q_sc[...] = (jnp.dot(nq, wq_ref[...],
                             preferred_element_type=jnp.float32)
                     + bq_ref[...]).astype(cdt)                 # (tq, E)
        m_sc[...] = jnp.full_like(m_sc, -jnp.inf)
        l_sc[...] = jnp.zeros_like(l_sc)
        acc_sc[...] = jnp.zeros_like(acc_sc)

    # --- one flash-attention step over this kv tile --------------------------
    q = q_sc[...]                                               # (tq, E)
    kv = kv_sc[ki]                                              # (tk, 2E)
    keep = mask_ref[0] != 0                                     # (tq, tk) bool
    for h in range(H):            # static loop; per-head state lives in scratch
        lo = h * dh
        # q_h @ k_h^T, contracting on Dh (no in-kernel transpose).
        s = lax.dot_general(q[:, lo:lo + dh], kv[:, lo:lo + dh],
                            (((1,), (1,)), ((), ())),
                            preferred_element_type=jnp.float32) * scale
        s = jnp.where(keep, s, -1e9)                            # torch masked_fill
        m_prev = m_sc[h]                                        # (tq, 1)
        m_new = jnp.maximum(m_prev, jnp.max(s, axis=-1, keepdims=True))
        alpha = jnp.exp(m_prev - m_new)
        p = jnp.exp(s - m_new)
        l_sc[h] = alpha * l_sc[h] + jnp.sum(p, axis=-1, keepdims=True)
        acc_sc[h] = alpha * acc_sc[h] + jnp.dot(
            p.astype(cdt), kv[:, E + lo:E + lo + dh],
            preferred_element_type=jnp.float32)
        m_sc[h] = m_new

    # --- finalize: normalize, output projection, residual (last kv tile) -----
    @pl.when(ki == nk - 1)
    def _():
        for h in range(H):
            lo = h * dh
            inv = pl.reciprocal(l_sc[h], approx=False)          # EUP, exact
            ctx_sc[:, lo:lo + dh] = acc_sc[h] * inv
        out = (jnp.dot(ctx_sc[...].astype(cdt), wo_ref[...],
                       preferred_element_type=jnp.float32) + bo_ref[...])
        o_ref[0] = (xq_ref[0].astype(jnp.float32) + out).astype(o_ref.dtype)


def attention_block(xq, xkv, mask, gamma, beta, mha, *, norm_kv, vmem_limit):
    """residual(xq) + MHA(query = LN(xq), key/value = (LN(xkv) if norm_kv else xkv))."""
    B, Sq, E = xq.shape
    Sk = xkv.shape[1]
    H = mha["num_heads"]
    dh = E // H
    tq = _pick_tile(Sq, (256, 128, 64, 32, 16, 8))
    tk = _pick_tile(Sk, (512, 256, 128, 64, 32, 16, 8))
    nq, nk = Sq // tq, Sk // tk
    kernel = functools.partial(_attn_block_kernel, num_heads=H, norm_kv=norm_kv)
    return pl.pallas_call(
        kernel,
        out_shape=jax.ShapeDtypeStruct((B, Sq, E), xq.dtype),
        grid=(B, nq, nk),
        in_specs=[
            pl.BlockSpec((1, tq, E), lambda b, qi, ki: (b, qi, 0)),   # xq
            pl.BlockSpec((1, tk, E), lambda b, qi, ki: (b, ki, 0)),   # xkv
            pl.BlockSpec((1, E), lambda b, qi, ki: (0, 0)),           # ln gamma
            pl.BlockSpec((1, E), lambda b, qi, ki: (0, 0)),           # ln beta
            pl.BlockSpec((E, E), lambda b, qi, ki: (0, 0)),           # wq (bf16)
            pl.BlockSpec((1, E), lambda b, qi, ki: (0, 0)),           # bq
            pl.BlockSpec((E, 2 * E), lambda b, qi, ki: (0, 0)),       # wkv (bf16)
            pl.BlockSpec((1, 2 * E), lambda b, qi, ki: (0, 0)),       # bkv
            pl.BlockSpec((E, E), lambda b, qi, ki: (0, 0)),           # wo (bf16)
            pl.BlockSpec((1, E), lambda b, qi, ki: (0, 0)),           # bo
            pl.BlockSpec((1, tq, tk), lambda b, qi, ki: (b, qi, ki)), # int8 mask
        ],
        out_specs=pl.BlockSpec((1, tq, E), lambda b, qi, ki: (b, qi, 0)),
        scratch_shapes=[
            pltpu.VMEM((tq, E), COMPUTE_DTYPE),              # q_sc
            pltpu.VMEM((nk, tk, 2 * E), COMPUTE_DTYPE),      # kv_sc (full K/V cache)
            pltpu.VMEM((H, tq, 1), jnp.float32),             # m_sc
            pltpu.VMEM((H, tq, 1), jnp.float32),             # l_sc
            pltpu.VMEM((H, tq, dh), jnp.float32),            # acc_sc
            pltpu.VMEM((tq, E), jnp.float32),                # ctx_sc
        ],
        compiler_params=pltpu.CompilerParams(
            dimension_semantics=("parallel", "arbitrary", "arbitrary"),
            vmem_limit_bytes=vmem_limit),
    )(xq, xkv, gamma.reshape(1, E), beta.reshape(1, E),
      mha["wq"], mha["bq"].reshape(1, E),
      mha["wkv"], mha["bkv"].reshape(1, 2 * E),
      mha["wo"], mha["bo"].reshape(1, E),
      mask)


# ----------------------------- LN + FFN block kernel -------------------------
def _ln_ffn_block_kernel(x_ref, g_ref, b_ref, w1_ref, b1_ref, w2_ref, b2_ref,
                         o_ref, nx_sc, acc_sc):
    """Grid = (row tile i, ff_mid reduction tile k). acc_sc: (tm, E) f32."""
    k = pl.program_id(1)

    @pl.when(k == 0)
    def _():
        nx_sc[...] = _layernorm_f32(x_ref[...], g_ref[...],
                                    b_ref[...]).astype(nx_sc.dtype)
        acc_sc[...] = jnp.zeros_like(acc_sc)

    hmid = (jnp.dot(nx_sc[...], w1_ref[...],
                    preferred_element_type=jnp.float32) + b1_ref[...])
    hmid = jnp.maximum(hmid, 0.0).astype(nx_sc.dtype)
    acc_sc[...] += jnp.dot(hmid, w2_ref[...],
                           preferred_element_type=jnp.float32)

    @pl.when(k == pl.num_programs(1) - 1)
    def _():
        y = acc_sc[...] + b2_ref[...]
        o_ref[...] = (x_ref[...].astype(jnp.float32) + y).astype(o_ref.dtype)


def ffn_block(x, gamma, beta, w1, b1, w2, b2, *, vmem_limit):
    B, S, E = x.shape
    N = B * S
    M = w1.shape[1]
    x2 = x.reshape(N, E)
    tm = _pick_tile(N, (256, 128, 64, 32, 16, 8))
    if N // tm < 2 and tm % 16 == 0:
        tm //= 2                      # >= 2 parallel row tiles for v7x megacore
    tkm = _pick_tile(M, (512, 256, 128, 64, 32, 16, 8))
    out = pl.pallas_call(
        _ln_ffn_block_kernel,
        out_shape=jax.ShapeDtypeStruct((N, E), x.dtype),
        grid=(N // tm, M // tkm),
        in_specs=[
            pl.BlockSpec((tm, E), lambda i, k: (i, 0)),
            pl.BlockSpec((1, E), lambda i, k: (0, 0)),
            pl.BlockSpec((1, E), lambda i, k: (0, 0)),
            pl.BlockSpec((E, tkm), lambda i, k: (0, k)),     # w1 tile (bf16)
            pl.BlockSpec((1, tkm), lambda i, k: (0, k)),     # b1 tile
            pl.BlockSpec((tkm, E), lambda i, k: (k, 0)),     # w2 tile (bf16)
            pl.BlockSpec((1, E), lambda i, k: (0, 0)),       # b2
        ],
        out_specs=pl.BlockSpec((tm, E), lambda i, k: (i, 0)),
        scratch_shapes=[
            pltpu.VMEM((tm, E), COMPUTE_DTYPE),              # LN(x) cache
            pltpu.VMEM((tm, E), jnp.float32),                # f32 accumulator
        ],
        compiler_params=pltpu.CompilerParams(
            dimension_semantics=("parallel", "arbitrary"),
            vmem_limit_bytes=vmem_limit),
    )(x2, gamma.reshape(1, E), beta.reshape(1, E),
      w1, b1.reshape(1, M), w2, b2.reshape(1, E))
    return out.reshape(B, S, E)


# ----------------------------- Decoder layer forward -------------------------
def decoder_layer(x, enc_out, src_mask, trg_mask, params):
    """h = x + SelfMHA(LN1(x), trg_mask)
       h = h + CrossMHA(LN2(h), enc_out, src_mask)
       out = h + FFN(LN3(h))          (all dropouts are p=0 -> identity)"""
    B, Sq, E = x.shape
    Sk = enc_out.shape[1]
    vmem_limit = _default_vmem_limit()

    # Masks stay in their (small) integer/bool dtype; the -1e9 additive form is
    # applied in-kernel (no dense f32 mask traffic, no wrapper elementwise pass).
    trg_m = jnp.broadcast_to(trg_mask, (B, 1, Sq, Sq)).reshape(B, Sq, Sq)
    src_m = jnp.broadcast_to(src_mask, (B, 1, Sq, Sk)).reshape(B, Sq, Sk)

    h = attention_block(x, x, trg_m, params["ln1_g"], params["ln1_b"],
                        params["mha_self"], norm_kv=True, vmem_limit=vmem_limit)
    h = attention_block(h, enc_out, src_m, params["ln2_g"], params["ln2_b"],
                        params["mha_enc"], norm_kv=False, vmem_limit=vmem_limit)
    return ffn_block(h, params["ln3_g"], params["ln3_b"],
                     params["ff_w1"], params["ff_b1"],
                     params["ff_w2"], params["ff_b2"], vmem_limit=vmem_limit)


# ----------------------------- Deterministic parameter init ------------------
def init_params(key, emb_dim, num_heads, ff_mid_dim, weight_dtype=COMPUTE_DTYPE):
    # Big matrices in bf16 (per perf review); LN params / biases stay f32.
    def w(k, shape, scale=0.02):
        return (scale * jax.random.normal(k, shape)).astype(weight_dtype)

    keys = jax.random.split(key, 10)

    def mha_params(ks):
        wq, wk, wv, wo = (w(ks[i], (emb_dim, emb_dim)) for i in range(4))
        return {
            "num_heads": num_heads,
            "wq": wq,
            "bq": jnp.zeros((emb_dim,), jnp.float32),
            "wkv": jnp.concatenate([wk, wv], axis=1),        # (E, 2E)
            "bkv": jnp.zeros((2 * emb_dim,), jnp.float32),
            "wo": wo,
            "bo": jnp.zeros((emb_dim,), jnp.float32),
        }

    return {
        "ln1_g": jnp.ones((emb_dim,), jnp.float32),
        "ln1_b": jnp.zeros((emb_dim,), jnp.float32),
        "ln2_g": jnp.ones((emb_dim,), jnp.float32),
        "ln2_b": jnp.zeros((emb_dim,), jnp.float32),
        "ln3_g": jnp.ones((emb_dim,), jnp.float32),
        "ln3_b": jnp.zeros((emb_dim,), jnp.float32),
        "mha_self": mha_params(keys[0:4]),
        "mha_enc": mha_params(keys[4:8]),
        "ff_w1": w(keys[8], (emb_dim, ff_mid_dim)),
        "ff_b1": jnp.zeros((ff_mid_dim,), jnp.float32),
        "ff_w2": w(keys[9], (ff_mid_dim, emb_dim)),
        "ff_b2": jnp.zeros((emb_dim,), jnp.float32),
    }


if __name__ == "__main__":
    key = jax.random.PRNGKey(0)
    B, S_trg, S_src = 2, 8, 8
    EMB, HEADS, FF_MID = 32, 4, 64

    k_x, k_enc, k_p = jax.random.split(key, 3)
    x = jax.random.normal(k_x, (B, S_trg, EMB), jnp.float32)
    enc_out = jax.random.normal(k_enc, (B, S_src, EMB), jnp.float32)

    # target mask: causal; source mask: all ones — int8, nonzero = keep
    trg_mask = jnp.tril(jnp.ones((S_trg, S_trg), jnp.int8))[None, None]
    trg_mask = jnp.broadcast_to(trg_mask, (B, 1, S_trg, S_trg))
    src_mask = jnp.ones((B, 1, S_trg, S_src), jnp.int8)

    params = init_params(k_p, EMB, HEADS, FF_MID)

    out = decoder_layer(x, enc_out, src_mask, trg_mask, params)
    out = jax.block_until_ready(out)
    assert out.shape == (B, S_trg, EMB) and bool(jnp.all(jnp.isfinite(out)))
    print("KERNEL_OK")
</pallas_src>

<mosaic_0001>
module attributes {stable_mosaic.version = 11 : i64} {
  func.func @_attn_block_kernel(%arg0: i32, %arg1: i32, %arg2: i32, %arg3: memref<1x8x32xf32, #tpu.memory_space<vmem>>, %arg4: memref<1x8x32xf32, #tpu.memory_space<vmem>>, %arg5: memref<1x32xf32, #tpu.memory_space<vmem>>, %arg6: memref<1x32xf32, #tpu.memory_space<vmem>>, %arg7: memref<32x32xbf16, #tpu.memory_space<vmem>>, %arg8: memref<1x32xf32, #tpu.memory_space<vmem>>, %arg9: memref<32x64xbf16, #tpu.memory_space<vmem>>, %arg10: memref<1x64xf32, #tpu.memory_space<vmem>>, %arg11: memref<32x32xbf16, #tpu.memory_space<vmem>>, %arg12: memref<1x32xf32, #tpu.memory_space<vmem>>, %arg13: memref<1x8x8xi8, #tpu.memory_space<vmem>>, %arg14: memref<1x8x32xf32, #tpu.memory_space<vmem>>, %arg15: memref<8x32xbf16, #tpu.memory_space<vmem>>, %arg16: memref<1x8x64xbf16, #tpu.memory_space<vmem>>, %arg17: memref<4x8x1xf32, #tpu.memory_space<vmem>>, %arg18: memref<4x8x1xf32, #tpu.memory_space<vmem>>, %arg19: memref<4x8x8xf32, #tpu.memory_space<vmem>>, %arg20: memref<8x32xf32, #tpu.memory_space<vmem>>) attributes {dimension_semantics = [#tpu.dimension_semantics<parallel>, #tpu.dimension_semantics<arbitrary>, #tpu.dimension_semantics<arbitrary>], iteration_bounds = array<i64: 2, 1, 1>, scalar_prefetch = 0 : i64, scratch_operands = 6 : i64, tpu.core_type = #tpu.core_type<tc>, window_params = [{transform_indices = @transform_0, window_bounds = array<i64: 1, 8, 32>}, {transform_indices = @transform_1, window_bounds = array<i64: 1, 8, 32>}, {pipeline_mode = #tpu.pipeline_mode<synchronous>, transform_indices = @transform_2, window_bounds = array<i64: 1, 32>}, {pipeline_mode = #tpu.pipeline_mode<synchronous>, transform_indices = @transform_3, window_bounds = array<i64: 1, 32>}, {pipeline_mode = #tpu.pipeline_mode<synchronous>, transform_indices = @transform_4, window_bounds = array<i64: 32, 32>}, {pipeline_mode = #tpu.pipeline_mode<synchronous>, transform_indices = @transform_5, window_bounds = array<i64: 1, 32>}, {pipeline_mode = #tpu.pipeline_mode<synchronous>, transform_indices = @transform_6, window_bounds = array<i64: 32, 64>}, {pipeline_mode = #tpu.pipeline_mode<synchronous>, transform_indices = @transform_7, window_bounds = array<i64: 1, 64>}, {pipeline_mode = #tpu.pipeline_mode<synchronous>, transform_indices = @transform_8, window_bounds = array<i64: 32, 32>}, {pipeline_mode = #tpu.pipeline_mode<synchronous>, transform_indices = @transform_9, window_bounds = array<i64: 1, 32>}, {transform_indices = @transform_10, window_bounds = array<i64: 1, 8, 8>}, {transform_indices = @transform_11, window_bounds = array<i64: 1, 8, 32>}]} {
    %c0_i32 = arith.constant 0 : i32
    %0 = arith.cmpi eq, %arg1, %c0_i32 : i32
    %1 = arith.extui %0 : i1 to i32
    %c0_i32_0 = arith.constant 0 : i32
    %2 = arith.cmpi ne, %1, %c0_i32_0 : i32
    scf.if %2 {
      %c0_103 = arith.constant 0 : index
      %c0_104 = arith.constant 0 : index
      %c0_105 = arith.constant 0 : index
      %177 = vector.load %arg4[%c0_103, %c0_104, %c0_105] : memref<1x8x32xf32, #tpu.memory_space<vmem>>, vector<1x8x32xf32>
      %178 = vector.shape_cast %177 : vector<1x8x32xf32> to vector<8x32xf32>
      %c0_106 = arith.constant 0 : index
      %c0_107 = arith.constant 0 : index
      %179 = vector.load %arg5[%c0_106, %c0_107] : memref<1x32xf32, #tpu.memory_space<vmem>>, vector<1x32xf32>
      %c0_108 = arith.constant 0 : index
      %c0_109 = arith.constant 0 : index
      %180 = vector.load %arg6[%c0_108, %c0_109] : memref<1x32xf32, #tpu.memory_space<vmem>>, vector<1x32xf32>
      %cst_110 = arith.constant dense<0.000000e+00> : vector<8xf32>
      %181 = vector.multi_reduction <add>, %178, %cst_110 [1] : vector<8x32xf32> to vector<8xf32>
      %182 = vector.shape_cast %181 : vector<8xf32> to vector<8x1xf32>
      %cst_111 = arith.constant 3.200000e+01 : f32
      %183 = vector.broadcast %cst_111 : f32 to vector<8x1xf32>
      %184 = arith.divf %182, %183 : vector<8x1xf32>
      %185 = vector.broadcast %184 : vector<8x1xf32> to vector<8x32xf32>
      %186 = arith.subf %178, %185 : vector<8x32xf32>
      %187 = arith.mulf %186, %186 : vector<8x32xf32>
      %cst_112 = arith.constant dense<0.000000e+00> : vector<8xf32>
      %188 = vector.multi_reduction <add>, %187, %cst_112 [1] : vector<8x32xf32> to vector<8xf32>
      %189 = vector.shape_cast %188 : vector<8xf32> to vector<8x1xf32>
      %cst_113 = arith.constant 3.200000e+01 : f32
      %190 = vector.broadcast %cst_113 : f32 to vector<8x1xf32>
      %191 = arith.divf %189, %190 : vector<8x1xf32>
      %192 = vector.broadcast %184 : vector<8x1xf32> to vector<8x32xf32>
      %193 = arith.subf %178, %192 : vector<8x32xf32>
      %cst_114 = arith.constant 9.99999997E-7 : f32
      %194 = vector.broadcast %cst_114 : f32 to vector<8x1xf32>
      %195 = arith.addf %191, %194 : vector<8x1xf32>
      %196 = math.rsqrt %195 : vector<8x1xf32>
      %197 = vector.broadcast %196 : vector<8x1xf32> to vector<8x32xf32>
      %198 = arith.mulf %193, %197 : vector<8x32xf32>
      %199 = vector.broadcast %179 : vector<1x32xf32> to vector<8x32xf32>
      %200 = arith.mulf %198, %199 : vector<8x32xf32>
      %201 = vector.broadcast %180 : vector<1x32xf32> to vector<8x32xf32>
      %202 = arith.addf %200, %201 : vector<8x32xf32>
      %203 = arith.truncf %202 : vector<8x32xf32> to vector<8x32xbf16>
      %c0_115 = arith.constant 0 : index
      %c0_116 = arith.constant 0 : index
      %204 = vector.load %arg9[%c0_115, %c0_116] : memref<32x64xbf16, #tpu.memory_space<vmem>>, vector<32x64xbf16>
      %cst_117 = arith.constant dense<0.000000e+00> : vector<8x64xf32>
      %205 = tpu.matmul %203, %204, %cst_117 {dimension_numbers = #tpu.dot_dimension_numbers<[1], [0], [0], [1], [0, 0, 1, 1], [], []>} : vector<8x32xbf16>, vector<32x64xbf16>, vector<8x64xf32> -> vector<8x64xf32>
      %c0_118 = arith.constant 0 : index
      %c0_119 = arith.constant 0 : index
      %206 = vector.load %arg10[%c0_118, %c0_119] : memref<1x64xf32, #tpu.memory_space<vmem>>, vector<1x64xf32>
      %207 = vector.broadcast %206 : vector<1x64xf32> to vector<8x64xf32>
      %208 = arith.addf %205, %207 : vector<8x64xf32>
      %209 = arith.truncf %208 : vector<8x64xf32> to vector<8x64xbf16>
      %210 = arith.index_cast %arg2 : i32 to index
      %c0_120 = arith.constant 0 : index
      %c0_121 = arith.constant 0 : index
      %211 = vector.load %arg16[%210, %c0_120, %c0_121] : memref<1x8x64xbf16, #tpu.memory_space<vmem>>, vector<1x8x64xbf16>
      %212 = vector.shape_cast %211 : vector<1x8x64xbf16> to vector<8x64xbf16>
      %213 = vector.shape_cast %209 : vector<8x64xbf16> to vector<1x8x64xbf16>
      tpu.vector_store %arg16[%210, %c0_120, %c0_121], %213 {strides = array<i32>} : memref<1x8x64xbf16, #tpu.memory_space<vmem>>, vector<1x8x64xbf16>,
    } else {
    }
    %c0_i32_1 = arith.constant 0 : i32
    %3 = arith.cmpi eq, %arg2, %c0_i32_1 : i32
    %4 = arith.extui %3 : i1 to i32
    %c0_i32_2 = arith.constant 0 : i32
    %5 = arith.cmpi ne, %4, %c0_i32_2 : i32
    scf.if %5 {
      %c0_103 = arith.constant 0 : index
      %c0_104 = arith.constant 0 : index
      %c0_105 = arith.constant 0 : index
      %177 = vector.load %arg3[%c0_103, %c0_104, %c0_105] : memref<1x8x32xf32, #tpu.memory_space<vmem>>, vector<1x8x32xf32>
      %178 = vector.shape_cast %177 : vector<1x8x32xf32> to vector<8x32xf32>
      %c0_106 = arith.constant 0 : index
      %c0_107 = arith.constant 0 : index
      %179 = vector.load %arg5[%c0_106, %c0_107] : memref<1x32xf32, #tpu.memory_space<vmem>>, vector<1x32xf32>
      %c0_108 = arith.constant 0 : index
      %c0_109 = arith.constant 0 : index
      %180 = vector.load %arg6[%c0_108, %c0_109] : memref<1x32xf32, #tpu.memory_space<vmem>>, vector<1x32xf32>
      %cst_110 = arith.constant dense<0.000000e+00> : vector<8xf32>
      %181 = vector.multi_reduction <add>, %178, %cst_110 [1] : vector<8x32xf32> to vector<8xf32>
      %182 = vector.shape_cast %181 : vector<8xf32> to vector<8x1xf32>
      %cst_111 = arith.constant 3.200000e+01 : f32
      %183 = vector.broadcast %cst_111 : f32 to vector<8x1xf32>
      %184 = arith.divf %182, %183 : vector<8x1xf32>
      %185 = vector.broadcast %184 : vector<8x1xf32> to vector<8x32xf32>
      %186 = arith.subf %178, %185 : vector<8x32xf32>
      %187 = arith.mulf %186, %186 : vector<8x32xf32>
      %cst_112 = arith.constant dense<0.000000e+00> : vector<8xf32>
      %188 = vector.multi_reduction <add>, %187, %cst_112 [1] : vector<8x32xf32> to vector<8xf32>
      %189 = vector.shape_cast %188 : vector<8xf32> to vector<8x1xf32>
      %cst_113 = arith.constant 3.200000e+01 : f32
      %190 = vector.broadcast %cst_113 : f32 to vector<8x1xf32>
      %191 = arith.divf %189, %190 : vector<8x1xf32>
      %192 = vector.broadcast %184 : vector<8x1xf32> to vector<8x32xf32>
      %193 = arith.subf %178, %192 : vector<8x32xf32>
      %cst_114 = arith.constant 9.99999997E-7 : f32
      %194 = vector.broadcast %cst_114 : f32 to vector<8x1xf32>
      %195 = arith.addf %191, %194 : vector<8x1xf32>
      %196 = math.rsqrt %195 : vector<8x1xf32>
      %197 = vector.broadcast %196 : vector<8x1xf32> to vector<8x32xf32>
      %198 = arith.mulf %193, %197 : vector<8x32xf32>
      %199 = vector.broadcast %179 : vector<1x32xf32> to vector<8x32xf32>
      %200 = arith.mulf %198, %199 : vector<8x32xf32>
      %201 = vector.broadcast %180 : vector<1x32xf32> to vector<8x32xf32>
      %202 = arith.addf %200, %201 : vector<8x32xf32>
      %203 = arith.truncf %202 : vector<8x32xf32> to vector<8x32xbf16>
      %c0_115 = arith.constant 0 : index
      %c0_116 = arith.constant 0 : index
      %204 = vector.load %arg7[%c0_115, %c0_116] : memref<32x32xbf16, #tpu.memory_space<vmem>>, vector<32x32xbf16>
      %cst_117 = arith.constant dense<0.000000e+00> : vector<8x32xf32>
      %205 = tpu.matmul %203, %204, %cst_117 {dimension_numbers = #tpu.dot_dimension_numbers<[1], [0], [0], [1], [0, 0, 1, 1], [], []>} : vector<8x32xbf16>, vector<32x32xbf16>, vector<8x32xf32> -> vector<8x32xf32>
      %c0_118 = arith.constant 0 : index
      %c0_119 = arith.constant 0 : index
      %206 = vector.load %arg8[%c0_118, %c0_119] : memref<1x32xf32, #tpu.memory_space<vmem>>, vector<1x32xf32>
      %207 = vector.broadcast %206 : vector<1x32xf32> to vector<8x32xf32>
      %208 = arith.addf %205, %207 : vector<8x32xf32>
      %209 = arith.truncf %208 : vector<8x32xf32> to vector<8x32xbf16>
      %c0_120 = arith.constant 0 : index
      %c0_121 = arith.constant 0 : index
      %210 = vector.load %arg15[%c0_120, %c0_121] : memref<8x32xbf16, #tpu.memory_space<vmem>>, vector<8x32xbf16>
      tpu.vector_store %arg15[%c0_120, %c0_121], %209 {strides = array<i32>} : memref<8x32xbf16, #tpu.memory_space<vmem>>, vector<8x32xbf16>,
      %cst_122 = arith.constant 0xFF800000 : f32
      %211 = vector.broadcast %cst_122 : f32 to vector<4x8x1xf32>
      %c0_123 = arith.constant 0 : index
      %c0_124 = arith.constant 0 : index
      %c0_125 = arith.constant 0 : index
      %212 = vector.load %arg17[%c0_123, %c0_124, %c0_125] : memref<4x8x1xf32, #tpu.memory_space<vmem>>, vector<4x8x1xf32>
      tpu.vector_store %arg17[%c0_123, %c0_124, %c0_125], %211 {strides = array<i32>} : memref<4x8x1xf32, #tpu.memory_space<vmem>>, vector<4x8x1xf32>,
      %cst_126 = arith.constant 0.000000e+00 : f32
      %213 = vector.broadcast %cst_126 : f32 to vector<4x8x1xf32>
      %c0_127 = arith.constant 0 : index
      %c0_128 = arith.constant 0 : index
      %c0_129 = arith.constant 0 : index
      %214 = vector.load %arg18[%c0_127, %c0_128, %c0_129] : memref<4x8x1xf32, #tpu.memory_space<vmem>>, vector<4x8x1xf32>
      tpu.vector_store %arg18[%c0_127, %c0_128, %c0_129], %213 {strides = array<i32>} : memref<4x8x1xf32, #tpu.memory_space<vmem>>, vector<4x8x1xf32>,
      %cst_130 = arith.constant 0.000000e+00 : f32
      %215 = vector.broadcast %cst_130 : f32 to vector<4x8x8xf32>
      %c0_131 = arith.constant 0 : index
      %c0_132 = arith.constant 0 : index
      %c0_133 = arith.constant 0 : index
      %216 = vector.load %arg19[%c0_131, %c0_132, %c0_133] : memref<4x8x8xf32, #tpu.memory_space<vmem>>, vector<4x8x8xf32>
      tpu.vector_store %arg19[%c0_131, %c0_132, %c0_133], %215 {strides = array<i32>} : memref<4x8x8xf32, #tpu.memory_space<vmem>>, vector<4x8x8xf32>,
    } else {
    }
    %c0 = arith.constant 0 : index
    %c0_3 = arith.constant 0 : index
    %6 = vector.load %arg15[%c0, %c0_3] : memref<8x32xbf16, #tpu.memory_space<vmem>>, vector<8x32xbf16>
    %7 = arith.index_cast %arg2 : i32 to index
    %c0_4 = arith.constant 0 : index
    %c0_5 = arith.constant 0 : index
    %8 = vector.load %arg16[%7, %c0_4, %c0_5] : memref<1x8x64xbf16, #tpu.memory_space<vmem>>, vector<1x8x64xbf16>
    %9 = vector.shape_cast %8 : vector<1x8x64xbf16> to vector<8x64xbf16>
    %c0_6 = arith.constant 0 : index
    %c0_7 = arith.constant 0 : index
    %c0_8 = arith.constant 0 : index
    %10 = vector.load %arg13[%c0_6, %c0_7, %c0_8] : memref<1x8x8xi8, #tpu.memory_space<vmem>>, vector<1x8x8xi8>
    %11 = vector.shape_cast %10 : vector<1x8x8xi8> to vector<8x8xi8>
    %c0_i8 = arith.constant 0 : i8
    %12 = vector.broadcast %c0_i8 : i8 to vector<8x8xi8>
    %13 = arith.cmpi ne, %11, %12 : vector<8x8xi8>
    %14 = vector.extract_strided_slice %6 {offsets = [0, 0], sizes = [8, 8], strides = [1, 1]} : vector<8x32xbf16> to vector<8x8xbf16>
    %15 = vector.extract_strided_slice %9 {offsets = [0, 0], sizes = [8, 8], strides = [1, 1]} : vector<8x64xbf16> to vector<8x8xbf16>
    %cst = arith.constant dense<0.000000e+00> : vector<8x8xf32>
    %16 = tpu.matmul %14, %15, %cst {dimension_numbers = #tpu.dot_dimension_numbers<[1], [1], [0], [0], [0, 0, 1, 0], [], []>} : vector<8x8xbf16>, vector<8x8xbf16>, vector<8x8xf32> -> vector<8x8xf32>
    %cst_9 = arith.constant 0.353553385 : f32
    %17 = vector.broadcast %cst_9 : f32 to vector<8x8xf32>
    %18 = arith.mulf %16, %17 : vector<8x8xf32>
    %cst_10 = arith.constant -1.000000e+09 : f32
    %19 = vector.broadcast %cst_10 : f32 to vector<8x8xf32>
    %20 = arith.select %13, %18, %19 : vector<8x8xi1>, vector<8x8xf32>
    %c0_11 = arith.constant 0 : index
    %c0_12 = arith.constant 0 : index
    %c0_13 = arith.constant 0 : index
    %21 = vector.load %arg17[%c0_11, %c0_12, %c0_13] : memref<4x8x1xf32, #tpu.memory_space<vmem>>, vector<1x8x1xf32>
    %22 = vector.shape_cast %21 : vector<1x8x1xf32> to vector<8x1xf32>
    %cst_14 = arith.constant dense<0xFF800000> : vector<8xf32>
    %23 = vector.multi_reduction <maximumf>, %20, %cst_14 [1] : vector<8x8xf32> to vector<8xf32>
    %24 = vector.shape_cast %23 : vector<8xf32> to vector<8x1xf32>
    %25 = arith.maximumf %22, %24 : vector<8x1xf32>
    %26 = arith.subf %22, %25 : vector<8x1xf32>
    %27 = math.exp %26 : vector<8x1xf32>
    %28 = vector.broadcast %25 : vector<8x1xf32> to vector<8x8xf32>
    %29 = arith.subf %20, %28 : vector<8x8xf32>
    %30 = math.exp %29 : vector<8x8xf32>
    %c0_15 = arith.constant 0 : index
    %c0_16 = arith.constant 0 : index
    %c0_17 = arith.constant 0 : index
    %31 = vector.load %arg18[%c0_15, %c0_16, %c0_17] : memref<4x8x1xf32, #tpu.memory_space<vmem>>, vector<1x8x1xf32>
    %32 = vector.shape_cast %31 : vector<1x8x1xf32> to vector<8x1xf32>
    %33 = arith.mulf %27, %32 : vector<8x1xf32>
    %cst_18 = arith.constant dense<0.000000e+00> : vector<8xf32>
    %34 = vector.multi_reduction <add>, %30, %cst_18 [1] : vector<8x8xf32> to vector<8xf32>
    %35 = vector.shape_cast %34 : vector<8xf32> to vector<8x1xf32>
    %36 = arith.addf %33, %35 : vector<8x1xf32>
    %c0_19 = arith.constant 0 : index
    %c0_20 = arith.constant 0 : index
    %c0_21 = arith.constant 0 : index
    %37 = vector.load %arg18[%c0_19, %c0_20, %c0_21] : memref<4x8x1xf32, #tpu.memory_space<vmem>>, vector<1x8x1xf32>
    %38 = vector.shape_cast %37 : vector<1x8x1xf32> to vector<8x1xf32>
    %39 = vector.shape_cast %36 : vector<8x1xf32> to vector<1x8x1xf32>
    tpu.vector_store %arg18[%c0_19, %c0_20, %c0_21], %39 {strides = array<i32>} : memref<4x8x1xf32, #tpu.memory_space<vmem>>, vector<1x8x1xf32>,
    %c0_22 = arith.constant 0 : index
    %c0_23 = arith.constant 0 : index
    %c0_24 = arith.constant 0 : index
    %40 = vector.load %arg19[%c0_22, %c0_23, %c0_24] : memref<4x8x8xf32, #tpu.memory_space<vmem>>, vector<1x8x8xf32>
    %41 = vector.shape_cast %40 : vector<1x8x8xf32> to vector<8x8xf32>
    %42 = vector.broadcast %27 : vector<8x1xf32> to vector<8x8xf32>
    %43 = arith.mulf %42, %41 : vector<8x8xf32>
    %44 = arith.truncf %30 : vector<8x8xf32> to vector<8x8xbf16>
    %45 = vector.extract_strided_slice %9 {offsets = [0, 32], sizes = [8, 8], strides = [1, 1]} : vector<8x64xbf16> to vector<8x8xbf16>
    %cst_25 = arith.constant dense<0.000000e+00> : vector<8x8xf32>
    %46 = tpu.matmul %44, %45, %cst_25 {dimension_numbers = #tpu.dot_dimension_numbers<[1], [0], [0], [1], [0, 0, 1, 1], [], []>} : vector<8x8xbf16>, vector<8x8xbf16>, vector<8x8xf32> -> vector<8x8xf32>
    %47 = arith.addf %43, %46 : vector<8x8xf32>
    %c0_26 = arith.constant 0 : index
    %c0_27 = arith.constant 0 : index
    %c0_28 = arith.constant 0 : index
    %48 = vector.load %arg19[%c0_26, %c0_27, %c0_28] : memref<4x8x8xf32, #tpu.memory_space<vmem>>, vector<1x8x8xf32>
    %49 = vector.shape_cast %48 : vector<1x8x8xf32> to vector<8x8xf32>
    %50 = vector.shape_cast %47 : vector<8x8xf32> to vector<1x8x8xf32>
    tpu.vector_store %arg19[%c0_26, %c0_27, %c0_28], %50 {strides = array<i32>} : memref<4x8x8xf32, #tpu.memory_space<vmem>>, vector<1x8x8xf32>,
    %c0_29 = arith.constant 0 : index
    %c0_30 = arith.constant 0 : index
    %c0_31 = arith.constant 0 : index
    %51 = vector.load %arg17[%c0_29, %c0_30, %c0_31] : memref<4x8x1xf32, #tpu.memory_space<vmem>>, vector<1x8x1xf32>
    %52 = vector.shape_cast %51 : vector<1x8x1xf32> to vector<8x1xf32>
    %53 = vector.shape_cast %25 : vector<8x1xf32> to vector<1x8x1xf32>
    tpu.vector_store %arg17[%c0_29, %c0_30, %c0_31], %53 {strides = array<i32>} : memref<4x8x1xf32, #tpu.memory_space<vmem>>, vector<1x8x1xf32>,
    %54 = vector.extract_strided_slice %6 {offsets = [0, 8], sizes = [8, 8], strides = [1, 1]} : vector<8x32xbf16> to vector<8x8xbf16>
    %55 = vector.extract_strided_slice %9 {offsets = [0, 8], sizes = [8, 8], strides = [1, 1]} : vector<8x64xbf16> to vector<8x8xbf16>
    %cst_32 = arith.constant dense<0.000000e+00> : vector<8x8xf32>
    %56 = tpu.matmul %54, %55, %cst_32 {dimension_numbers = #tpu.dot_dimension_numbers<[1], [1], [0], [0], [0, 0, 1, 0], [], []>} : vector<8x8xbf16>, vector<8x8xbf16>, vector<8x8xf32> -> vector<8x8xf32>
    %cst_33 = arith.constant 0.353553385 : f32
    %57 = vector.broadcast %cst_33 : f32 to vector<8x8xf32>
    %58 = arith.mulf %56, %57 : vector<8x8xf32>
    %cst_34 = arith.constant -1.000000e+09 : f32
    %59 = vector.broadcast %cst_34 : f32 to vector<8x8xf32>
    %60 = arith.select %13, %58, %59 : vector<8x8xi1>, vector<8x8xf32>
    %c1 = arith.constant 1 : index
    %c0_35 = arith.constant 0 : index
    %c0_36 = arith.constant 0 : index
    %61 = vector.load %arg17[%c1, %c0_35, %c0_36] : memref<4x8x1xf32, #tpu.memory_space<vmem>>, vector<1x8x1xf32>
    %62 = vector.shape_cast %61 : vector<1x8x1xf32> to vector<8x1xf32>
    %cst_37 = arith.constant dense<0xFF800000> : vector<8xf32>
    %63 = vector.multi_reduction <maximumf>, %60, %cst_37 [1] : vector<8x8xf32> to vector<8xf32>
    %64 = vector.shape_cast %63 : vector<8xf32> to vector<8x1xf32>
    %65 = arith.maximumf %62, %64 : vector<8x1xf32>
    %66 = arith.subf %62, %65 : vector<8x1xf32>
    %67 = math.exp %66 : vector<8x1xf32>
    %68 = vector.broadcast %65 : vector<8x1xf32> to vector<8x8xf32>
    %69 = arith.subf %60, %68 : vector<8x8xf32>
    %70 = math.exp %69 : vector<8x8xf32>
    %c1_38 = arith.constant 1 : index
    %c0_39 = arith.constant 0 : index
    %c0_40 = arith.constant 0 : index
    %71 = vector.load %arg18[%c1_38, %c0_39, %c0_40] : memref<4x8x1xf32, #tpu.memory_space<vmem>>, vector<1x8x1xf32>
    %72 = vector.shape_cast %71 : vector<1x8x1xf32> to vector<8x1xf32>
    %73 = arith.mulf %67, %72 : vector<8x1xf32>
    %cst_41 = arith.constant dense<0.000000e+00> : vector<8xf32>
    %74 = vector.multi_reduction <add>, %70, %cst_41 [1] : vector<8x8xf32> to vector<8xf32>
    %75 = vector.shape_cast %74 : vector<8xf32> to vector<8x1xf32>
    %76 = arith.addf %73, %75 : vector<8x1xf32>
    %c1_42 = arith.constant 1 : index
    %c0_43 = arith.constant 0 : index
    %c0_44 = arith.constant 0 : index
    %77 = vector.load %arg18[%c1_42, %c0_43, %c0_44] : memref<4x8x1xf32, #tpu.memory_space<vmem>>, vector<1x8x1xf32>
    %78 = vector.shape_cast %77 : vector<1x8x1xf32> to vector<8x1xf32>
    %79 = vector.shape_cast %76 : vector<8x1xf32> to vector<1x8x1xf32>
    tpu.vector_store %arg18[%c1_42, %c0_43, %c0_44], %79 {strides = array<i32>} : memref<4x8x1xf32, #tpu.memory_space<vmem>>, vector<1x8x1xf32>,
    %c1_45 = arith.constant 1 : index
    %c0_46 = arith.constant 0 : index
    %c0_47 = arith.constant 0 : index
    %80 = vector.load %arg19[%c1_45, %c0_46, %c0_47] : memref<4x8x8xf32, #tpu.memory_space<vmem>>, vector<1x8x8xf32>
    %81 = vector.shape_cast %80 : vector<1x8x8xf32> to vector<8x8xf32>
    %82 = vector.broadcast %67 : vector<8x1xf32> to vector<8x8xf32>
    %83 = arith.mulf %82, %81 : vector<8x8xf32>
    %84 = arith.truncf %70 : vector<8x8xf32> to vector<8x8xbf16>
    %85 = vector.extract_strided_slice %9 {offsets = [0, 40], sizes = [8, 8], strides = [1, 1]} : vector<8x64xbf16> to vector<8x8xbf16>
    %cst_48 = arith.constant dense<0.000000e+00> : vector<8x8xf32>
    %86 = tpu.matmul %84, %85, %cst_48 {dimension_numbers = #tpu.dot_dimension_numbers<[1], [0], [0], [1], [0, 0, 1, 1], [], []>} : vector<8x8xbf16>, vector<8x8xbf16>, vector<8x8xf32> -> vector<8x8xf32>
    %87 = arith.addf %83, %86 : vector<8x8xf32>
    %c1_49 = arith.constant 1 : index
    %c0_50 = arith.constant 0 : index
    %c0_51 = arith.constant 0 : index
    %88 = vector.load %arg19[%c1_49, %c0_50, %c0_51] : memref<4x8x8xf32, #tpu.memory_space<vmem>>, vector<1x8x8xf32>
    %89 = vector.shape_cast %88 : vector<1x8x8xf32> to vector<8x8xf32>
    %90 = vector.shape_cast %87 : vector<8x8xf32> to vector<1x8x8xf32>
    tpu.vector_store %arg19[%c1_49, %c0_50, %c0_51], %90 {strides = array<i32>} : memref<4x8x8xf32, #tpu.memory_space<vmem>>, vector<1x8x8xf32>,
    %c1_52 = arith.constant 1 : index
    %c0_53 = arith.constant 0 : index
    %c0_54 = arith.constant 0 : index
    %91 = vector.load %arg17[%c1_52, %c0_53, %c0_54] : memref<4x8x1xf32, #tpu.memory_space<vmem>>, vector<1x8x1xf32>
    %92 = vector.shape_cast %91 : vector<1x8x1xf32> to vector<8x1xf32>
    %93 = vector.shape_cast %65 : vector<8x1xf32> to vector<1x8x1xf32>
    tpu.vector_store %arg17[%c1_52, %c0_53, %c0_54], %93 {strides = array<i32>} : memref<4x8x1xf32, #tpu.memory_space<vmem>>, vector<1x8x1xf32>,
    %94 = vector.extract_strided_slice %6 {offsets = [0, 16], sizes = [8, 8], strides = [1, 1]} : vector<8x32xbf16> to vector<8x8xbf16>
    %95 = vector.extract_strided_slice %9 {offsets = [0, 16], sizes = [8, 8], strides = [1, 1]} : vector<8x64xbf16> to vector<8x8xbf16>
    %cst_55 = arith.constant dense<0.000000e+00> : vector<8x8xf32>
    %96 = tpu.matmul %94, %95, %cst_55 {dimension_numbers = #tpu.dot_dimension_numbers<[1], [1], [0], [0], [0, 0, 1, 0], [], []>} : vector<8x8xbf16>, vector<8x8xbf16>, vector<8x8xf32> -> vector<8x8xf32>
    %cst_56 = arith.constant 0.353553385 : f32
    %97 = vector.broadcast %cst_56 : f32 to vector<8x8xf32>
    %98 = arith.mulf %96, %97 : vector<8x8xf32>
    %cst_57 = arith.constant -1.000000e+09 : f32
    %99 = vector.broadcast %cst_57 : f32 to vector<8x8xf32>
    %100 = arith.select %13, %98, %99 : vector<8x8xi1>, vector<8x8xf32>
    %c2 = arith.constant 2 : index
    %c0_58 = arith.constant 0 : index
    %c0_59 = arith.constant 0 : index
    %101 = vector.load %arg17[%c2, %c0_58, %c0_59] : memref<4x8x1xf32, #tpu.memory_space<vmem>>, vector<1x8x1xf32>
    %102 = vector.shape_cast %101 : vector<1x8x1xf32> to vector<8x1xf32>
    %cst_60 = arith.constant dense<0xFF800000> : vector<8xf32>
    %103 = vector.multi_reduction <maximumf>, %100, %cst_60 [1] : vector<8x8xf32> to vector<8xf32>
    %104 = vector.shape_cast %103 : vector<8xf32> to vector<8x1xf32>
    %105 = arith.maximumf %102, %104 : vector<8x1xf32>
    %106 = arith.subf %102, %105 : vector<8x1xf32>
    %107 = math.exp %106 : vector<8x1xf32>
    %108 = vector.broadcast %105 : vector<8x1xf32> to vector<8x8xf32>
    %109 = arith.subf %100, %108 : vector<8x8xf32>
    %110 = math.exp %109 : vector<8x8xf32>
    %c2_61 = arith.constant 2 : index
    %c0_62 = arith.constant 0 : index
    %c0_63 = arith.constant 0 : index
    %111 = vector.load %arg18[%c2_61, %c0_62, %c0_63] : memref<4x8x1xf32, #tpu.memory_space<vmem>>, vector<1x8x1xf32>
    %112 = vector.shape_cast %111 : vector<1x8x1xf32> to vector<8x1xf32>
    %113 = arith.mulf %107, %112 : vector<8x1xf32>
    %cst_64 = arith.constant dense<0.000000e+00> : vector<8xf32>
    %114 = vector.multi_reduction <add>, %110, %cst_64 [1] : vector<8x8xf32> to vector<8xf32>
    %115 = vector.shape_cast %114 : vector<8xf32> to vector<8x1xf32>
    %116 = arith.addf %113, %115 : vector<8x1xf32>
    %c2_65 = arith.constant 2 : index
    %c0_66 = arith.constant 0 : index
    %c0_67 = arith.constant 0 : index
    %117 = vector.load %arg18[%c2_65, %c0_66, %c0_67] : memref<4x8x1xf32, #tpu.memory_space<vmem>>, vector<1x8x1xf32>
    %118 = vector.shape_cast %117 : vector<1x8x1xf32> to vector<8x1xf32>
    %119 = vector.shape_cast %116 : vector<8x1xf32> to vector<1x8x1xf32>
    tpu.vector_store %arg18[%c2_65, %c0_66, %c0_67], %119 {strides = array<i32>} : memref<4x8x1xf32, #tpu.memory_space<vmem>>, vector<1x8x1xf32>,
    %c2_68 = arith.constant 2 : index
    %c0_69 = arith.constant 0 : index
    %c0_70 = arith.constant 0 : index
    %120 = vector.load %arg19[%c2_68, %c0_69, %c0_70] : memref<4x8x8xf32, #tpu.memory_space<vmem>>, vector<1x8x8xf32>
    %121 = vector.shape_cast %120 : vector<1x8x8xf32> to vector<8x8xf32>
    %122 = vector.broadcast %107 : vector<8x1xf32> to vector<8x8xf32>
    %123 = arith.mulf %122, %121 : vector<8x8xf32>
    %124 = arith.truncf %110 : vector<8x8xf32> to vector<8x8xbf16>
    %125 = vector.extract_strided_slice %9 {offsets = [0, 48], sizes = [8, 8], strides = [1, 1]} : vector<8x64xbf16> to vector<8x8xbf16>
    %cst_71 = arith.constant dense<0.000000e+00> : vector<8x8xf32>
    %126 = tpu.matmul %124, %125, %cst_71 {dimension_numbers = #tpu.dot_dimension_numbers<[1], [0], [0], [1], [0, 0, 1, 1], [], []>} : vector<8x8xbf16>, vector<8x8xbf16>, vector<8x8xf32> -> vector<8x8xf32>
    %127 = arith.addf %123, %126 : vector<8x8xf32>
    %c2_72 = arith.constant 2 : index
    %c0_73 = arith.constant 0 : index
    %c0_74 = arith.constant 0 : index
    %128 = vector.load %arg19[%c2_72, %c0_73, %c0_74] : memref<4x8x8xf32, #tpu.memory_space<vmem>>, vector<1x8x8xf32>
    %129 = vector.shape_cast %128 : vector<1x8x8xf32> to vector<8x8xf32>
    %130 = vector.shape_cast %127 : vector<8x8xf32> to vector<1x8x8xf32>
    tpu.vector_store %arg19[%c2_72, %c0_73, %c0_74], %130 {strides = array<i32>} : memref<4x8x8xf32, #tpu.memory_space<vmem>>, vector<1x8x8xf32>,
    %c2_75 = arith.constant 2 : index
    %c0_76 = arith.constant 0 : index
    %c0_77 = arith.constant 0 : index
    %131 = vector.load %arg17[%c2_75, %c0_76, %c0_77] : memref<4x8x1xf32, #tpu.memory_space<vmem>>, vector<1x8x1xf32>
    %132 = vector.shape_cast %131 : vector<1x8x1xf32> to vector<8x1xf32>
    %133 = vector.shape_cast %105 : vector<8x1xf32> to vector<1x8x1xf32>
    tpu.vector_store %arg17[%c2_75, %c0_76, %c0_77], %133 {strides = array<i32>} : memref<4x8x1xf32, #tpu.memory_space<vmem>>, vector<1x8x1xf32>,
    %134 = vector.extract_strided_slice %6 {offsets = [0, 24], sizes = [8, 8], strides = [1, 1]} : vector<8x32xbf16> to vector<8x8xbf16>
    %135 = vector.extract_strided_slice %9 {offsets = [0, 24], sizes = [8, 8], strides = [1, 1]} : vector<8x64xbf16> to vector<8x8xbf16>
    %cst_78 = arith.constant dense<0.000000e+00> : vector<8x8xf32>
    %136 = tpu.matmul %134, %135, %cst_78 {dimension_numbers = #tpu.dot_dimension_numbers<[1], [1], [0], [0], [0, 0, 1, 0], [], []>} : vector<8x8xbf16>, vector<8x8xbf16>, vector<8x8xf32> -> vector<8x8xf32>
    %cst_79 = arith.constant 0.353553385 : f32
    %137 = vector.broadcast %cst_79 : f32 to vector<8x8xf32>
    %138 = arith.mulf %136, %137 : vector<8x8xf32>
    %cst_80 = arith.constant -1.000000e+09 : f32
    %139 = vector.broadcast %cst_80 : f32 to vector<8x8xf32>
    %140 = arith.select %13, %138, %139 : vector<8x8xi1>, vector<8x8xf32>
    %c3 = arith.constant 3 : index
    %c0_81 = arith.constant 0 : index
    %c0_82 = arith.constant 0 : index
    %141 = vector.load %arg17[%c3, %c0_81, %c0_82] : memref<4x8x1xf32, #tpu.memory_space<vmem>>, vector<1x8x1xf32>
    %142 = vector.shape_cast %141 : vector<1x8x1xf32> to vector<8x1xf32>
    %cst_83 = arith.constant dense<0xFF800000> : vector<8xf32>
    %143 = vector.multi_reduction <maximumf>, %140, %cst_83 [1] : vector<8x8xf32> to vector<8xf32>
    %144 = vector.shape_cast %143 : vector<8xf32> to vector<8x1xf32>
    %145 = arith.maximumf %142, %144 : vector<8x1xf32>
    %146 = arith.subf %142, %145 : vector<8x1xf32>
    %147 = math.exp %146 : vector<8x1xf32>
    %148 = vector.broadcast %145 : vector<8x1xf32> to vector<8x8xf32>
    %149 = arith.subf %140, %148 : vector<8x8xf32>
    %150 = math.exp %149 : vector<8x8xf32>
    %c3_84 = arith.constant 3 : index
    %c0_85 = arith.constant 0 : index
    %c0_86 = arith.constant 0 : index
    %151 = vector.load %arg18[%c3_84, %c0_85, %c0_86] : memref<4x8x1xf32, #tpu.memory_space<vmem>>, vector<1x8x1xf32>
    %152 = vector.shape_cast %151 : vector<1x8x1xf32> to vector<8x1xf32>
    %153 = arith.mulf %147, %152 : vector<8x1xf32>
    %cst_87 = arith.constant dense<0.000000e+00> : vector<8xf32>
    %154 = vector.multi_reduction <add>, %150, %cst_87 [1] : vector<8x8xf32> to vector<8xf32>
    %155 = vector.shape_cast %154 : vector<8xf32> to vector<8x1xf32>
    %156 = arith.addf %153, %155 : vector<8x1xf32>
    %c3_88 = arith.constant 3 : index
    %c0_89 = arith.constant 0 : index
    %c0_90 = arith.constant 0 : index
    %157 = vector.load %arg18[%c3_88, %c0_89, %c0_90] : memref<4x8x1xf32, #tpu.memory_space<vmem>>, vector<1x8x1xf32>
    %158 = vector.shape_cast %157 : vector<1x8x1xf32> to vector<8x1xf32>
    %159 = vector.shape_cast %156 : vector<8x1xf32> to vector<1x8x1xf32>
    tpu.vector_store %arg18[%c3_88, %c0_89, %c0_90], %159 {strides = array<i32>} : memref<4x8x1xf32, #tpu.memory_space<vmem>>, vector<1x8x1xf32>,
    %c3_91 = arith.constant 3 : index
    %c0_92 = arith.constant 0 : index
    %c0_93 = arith.constant 0 : index
    %160 = vector.load %arg19[%c3_91, %c0_92, %c0_93] : memref<4x8x8xf32, #tpu.memory_space<vmem>>, vector<1x8x8xf32>
    %161 = vector.shape_cast %160 : vector<1x8x8xf32> to vector<8x8xf32>
    %162 = vector.broadcast %147 : vector<8x1xf32> to vector<8x8xf32>
    %163 = arith.mulf %162, %161 : vector<8x8xf32>
    %164 = arith.truncf %150 : vector<8x8xf32> to vector<8x8xbf16>
    %165 = vector.extract_strided_slice %9 {offsets = [0, 56], sizes = [8, 8], strides = [1, 1]} : vector<8x64xbf16> to vector<8x8xbf16>
    %cst_94 = arith.constant dense<0.000000e+00> : vector<8x8xf32>
    %166 = tpu.matmul %164, %165, %cst_94 {dimension_numbers = #tpu.dot_dimension_numbers<[1], [0], [0], [1], [0, 0, 1, 1], [], []>} : vector<8x8xbf16>, vector<8x8xbf16>, vector<8x8xf32> -> vector<8x8xf32>
    %167 = arith.addf %163, %166 : vector<8x8xf32>
    %c3_95 = arith.constant 3 : index
    %c0_96 = arith.constant 0 : index
    %c0_97 = arith.constant 0 : index
    %168 = vector.load %arg19[%c3_95, %c0_96, %c0_97] : memref<4x8x8xf32, #tpu.memory_space<vmem>>, vector<1x8x8xf32>
    %169 = vector.shape_cast %168 : vector<1x8x8xf32> to vector<8x8xf32>
    %170 = vector.shape_cast %167 : vector<8x8xf32> to vector<1x8x8xf32>
    tpu.vector_store %arg19[%c3_95, %c0_96, %c0_97], %170 {strides = array<i32>} : memref<4x8x8xf32, #tpu.memory_space<vmem>>, vector<1x8x8xf32>,
    %c3_98 = arith.constant 3 : index
    %c0_99 = arith.constant 0 : index
    %c0_100 = arith.constant 0 : index
    %171 = vector.load %arg17[%c3_98, %c0_99, %c0_100] : memref<4x8x1xf32, #tpu.memory_space<vmem>>, vector<1x8x1xf32>
    %172 = vector.shape_cast %171 : vector<1x8x1xf32> to vector<8x1xf32>
    %173 = vector.shape_cast %145 : vector<8x1xf32> to vector<1x8x1xf32>
    tpu.vector_store %arg17[%c3_98, %c0_99, %c0_100], %173 {strides = array<i32>} : memref<4x8x1xf32, #tpu.memory_space<vmem>>, vector<1x8x1xf32>,
    %c0_i32_101 = arith.constant 0 : i32
    %174 = arith.cmpi eq, %arg2, %c0_i32_101 : i32
    %175 = arith.extui %174 : i1 to i32
    %c0_i32_102 = arith.constant 0 : i32
    %176 = arith.cmpi ne, %175, %c0_i32_102 : i32
    scf.if %176 {
      %c0_103 = arith.constant 0 : index
      %c0_104 = arith.constant 0 : index
      %c0_105 = arith.constant 0 : index
      %177 = vector.load %arg18[%c0_103, %c0_104, %c0_105] : memref<4x8x1xf32, #tpu.memory_space<vmem>>, vector<1x8x1xf32>
      %178 = vector.shape_cast %177 : vector<1x8x1xf32> to vector<8x1xf32>
      %179 = tpu.reciprocal %178 : vector<8x1xf32> -> vector<8x1xf32>
      %c0_106 = arith.constant 0 : index
      %c0_107 = arith.constant 0 : index
      %c0_108 = arith.constant 0 : index
      %180 = vector.load %arg19[%c0_106, %c0_107, %c0_108] : memref<4x8x8xf32, #tpu.memory_space<vmem>>, vector<1x8x8xf32>
      %181 = vector.shape_cast %180 : vector<1x8x8xf32> to vector<8x8xf32>
      %182 = vector.broadcast %179 : vector<8x1xf32> to vector<8x8xf32>
      %183 = arith.mulf %181, %182 : vector<8x8xf32>
      %c0_109 = arith.constant 0 : index
      %c0_110 = arith.constant 0 : index
      %184 = vector.load %arg20[%c0_109, %c0_110] : memref<8x32xf32, #tpu.memory_space<vmem>>, vector<8x8xf32>
      tpu.vector_store %arg20[%c0_109, %c0_110], %183 {strides = array<i32>} : memref<8x32xf32, #tpu.memory_space<vmem>>, vector<8x8xf32>,
      %c1_111 = arith.constant 1 : index
      %c0_112 = arith.constant 0 : index
      %c0_113 = arith.constant 0 : index
      %185 = vector.load %arg18[%c1_111, %c0_112, %c0_113] : memref<4x8x1xf32, #tpu.memory_space<vmem>>, vector<1x8x1xf32>
      %186 = vector.shape_cast %185 : vector<1x8x1xf32> to vector<8x1xf32>
      %187 = tpu.reciprocal %186 : vector<8x1xf32> -> vector<8x1xf32>
      %c1_114 = arith.constant 1 : index
      %c0_115 = arith.constant 0 : index
      %c0_116 = arith.constant 0 : index
      %188 = vector.load %arg19[%c1_114, %c0_115, %c0_116] : memref<4x8x8xf32, #tpu.memory_space<vmem>>, vector<1x8x8xf32>
      %189 = vector.shape_cast %188 : vector<1x8x8xf32> to vector<8x8xf32>
      %190 = vector.broadcast %187 : vector<8x1xf32> to vector<8x8xf32>
      %191 = arith.mulf %189, %190 : vector<8x8xf32>
      %c0_117 = arith.constant 0 : index
      %c8 = arith.constant 8 : index
      %192 = vector.load %arg20[%c0_117, %c8] : memref<8x32xf32, #tpu.memory_space<vmem>>, vector<8x8xf32>
      tpu.vector_store %arg20[%c0_117, %c8], %191 {strides = array<i32>} : memref<8x32xf32, #tpu.memory_space<vmem>>, vector<8x8xf32>,
      %c2_118 = arith.constant 2 : index
      %c0_119 = arith.constant 0 : index
      %c0_120 = arith.constant 0 : index
      %193 = vector.load %arg18[%c2_118, %c0_119, %c0_120] : memref<4x8x1xf32, #tpu.memory_space<vmem>>, vector<1x8x1xf32>
      %194 = vector.shape_cast %193 : vector<1x8x1xf32> to vector<8x1xf32>
      %195 = tpu.reciprocal %194 : vector<8x1xf32> -> vector<8x1xf32>
      %c2_121 = arith.constant 2 : index
      %c0_122 = arith.constant 0 : index
      %c0_123 = arith.constant 0 : index
      %196 = vector.load %arg19[%c2_121, %c0_122, %c0_123] : memref<4x8x8xf32, #tpu.memory_space<vmem>>, vector<1x8x8xf32>
      %197 = vector.shape_cast %196 : vector<1x8x8xf32> to vector<8x8xf32>
      %198 = vector.broadcast %195 : vector<8x1xf32> to vector<8x8xf32>
      %199 = arith.mulf %197, %198 : vector<8x8xf32>
      %c0_124 = arith.constant 0 : index
      %c16 = arith.constant 16 : index
      %200 = vector.load %arg20[%c0_124, %c16] : memref<8x32xf32, #tpu.memory_space<vmem>>, vector<8x8xf32>
      tpu.vector_store %arg20[%c0_124, %c16], %199 {strides = array<i32>} : memref<8x32xf32, #tpu.memory_space<vmem>>, vector<8x8xf32>,
      %c3_125 = arith.constant 3 : index
      %c0_126 = arith.constant 0 : index
      %c0_127 = arith.constant 0 : index
      %201 = vector.load %arg18[%c3_125, %c0_126, %c0_127] : memref<4x8x1xf32, #tpu.memory_space<vmem>>, vector<1x8x1xf32>
      %202 = vector.shape_cast %201 : vector<1x8x1xf32> to vector<8x1xf32>
      %203 = tpu.reciprocal %202 : vector<8x1xf32> -> vector<8x1xf32>
      %c3_128 = arith.constant 3 : index
      %c0_129 = arith.constant 0 : index
      %c0_130 = arith.constant 0 : index
      %204 = vector.load %arg19[%c3_128, %c0_129, %c0_130] : memref<4x8x8xf32, #tpu.memory_space<vmem>>, vector<1x8x8xf32>
      %205 = vector.shape_cast %204 : vector<1x8x8xf32> to vector<8x8xf32>
      %206 = vector.broadcast %203 : vector<8x1xf32> to vector<8x8xf32>
      %207 = arith.mulf %205, %206 : vector<8x8xf32>
      %c0_131 = arith.constant 0 : index
      %c24 = arith.constant 24 : index
      %208 = vector.load %arg20[%c0_131, %c24] : memref<8x32xf32, #tpu.memory_space<vmem>>, vector<8x8xf32>
      tpu.vector_store %arg20[%c0_131, %c24], %207 {strides = array<i32>} : memref<8x32xf32, #tpu.memory_space<vmem>>, vector<8x8xf32>,
      %c0_132 = arith.constant 0 : index
      %c0_133 = arith.constant 0 : index
      %209 = vector.load %arg20[%c0_132, %c0_133] : memref<8x32xf32, #tpu.memory_space<vmem>>, vector<8x32xf32>
      %210 = arith.truncf %209 : vector<8x32xf32> to vector<8x32xbf16>
      %c0_134 = arith.constant 0 : index
      %c0_135 = arith.constant 0 : index
      %211 = vector.load %arg11[%c0_134, %c0_135] : memref<32x32xbf16, #tpu.memory_space<vmem>>, vector<32x32xbf16>
      %cst_136 = arith.constant dense<0.000000e+00> : vector<8x32xf32>
      %212 = tpu.matmul %210, %211, %cst_136 {dimension_numbers = #tpu.dot_dimension_numbers<[1], [0], [0], [1], [0, 0, 1, 1], [], []>} : vector<8x32xbf16>, vector<32x32xbf16>, vector<8x32xf32> -> vector<8x32xf32>
      %c0_137 = arith.constant 0 : index
      %c0_138 = arith.constant 0 : index
      %213 = vector.load %arg12[%c0_137, %c0_138] : memref<1x32xf32, #tpu.memory_space<vmem>>, vector<1x32xf32>
      %214 = vector.broadcast %213 : vector<1x32xf32> to vector<8x32xf32>
      %215 = arith.addf %212, %214 : vector<8x32xf32>
      %c0_139 = arith.constant 0 : index
      %c0_140 = arith.constant 0 : index
      %c0_141 = arith.constant 0 : index
      %216 = vector.load %arg3[%c0_139, %c0_140, %c0_141] : memref<1x8x32xf32, #tpu.memory_space<vmem>>, vector<1x8x32xf32>
      %217 = vector.shape_cast %216 : vector<1x8x32xf32> to vector<8x32xf32>
      %218 = arith.addf %217, %215 : vector<8x32xf32>
      %c0_142 = arith.constant 0 : index
      %c0_143 = arith.constant 0 : index
      %c0_144 = arith.constant 0 : index
      %219 = vector.load %arg14[%c0_142, %c0_143, %c0_144] : memref<1x8x32xf32, #tpu.memory_space<vmem>>, vector<1x8x32xf32>
      %220 = vector.shape_cast %219 : vector<1x8x32xf32> to vector<8x32xf32>
      %221 = vector.shape_cast %218 : vector<8x32xf32> to vector<1x8x32xf32>
      tpu.vector_store %arg14[%c0_142, %c0_143, %c0_144], %221 {strides = array<i32>} : memref<1x8x32xf32, #tpu.memory_space<vmem>>, vector<1x8x32xf32>,
    } else {
    }
    return
  }
  func.func @transform_0(%arg0: i32, %arg1: i32, %arg2: i32) -> (i32, i32, i32) {
    %c0_i32 = arith.constant 0 : i32
    %c0_i32_0 = arith.constant 0 : i32
    return %arg0, %arg1, %c0_i32 : i32, i32, i32
  }
  func.func @transform_1(%arg0: i32, %arg1: i32, %arg2: i32) -> (i32, i32, i32) {
    %c0_i32 = arith.constant 0 : i32
    %c0_i32_0 = arith.constant 0 : i32
    return %arg0, %arg2, %c0_i32 : i32, i32, i32
  }
  func.func @transform_2(%arg0: i32, %arg1: i32, %arg2: i32) -> (i32, i32) {
    %c0_i32 = arith.constant 0 : i32
    %c0_i32_0 = arith.constant 0 : i32
    %c0_i32_1 = arith.constant 0 : i32
    return %c0_i32, %c0_i32_0 : i32, i32
  }
  func.func @transform_3(%arg0: i32, %arg1: i32, %arg2: i32) -> (i32, i32) {
    %c0_i32 = arith.constant 0 : i32
    %c0_i32_0 = arith.constant 0 : i32
    %c0_i32_1 = arith.constant 0 : i32
    return %c0_i32, %c0_i32_0 : i32, i32
  }
  func.func @transform_4(%arg0: i32, %arg1: i32, %arg2: i32) -> (i32, i32) {
    %c0_i32 = arith.constant 0 : i32
    %c0_i32_0 = arith.constant 0 : i32
    %c0_i32_1 = arith.constant 0 : i32
    return %c0_i32, %c0_i32_0 : i32, i32
  }
  func.func @transform_5(%arg0: i32, %arg1: i32, %arg2: i32) -> (i32, i32) {
    %c0_i32 = arith.constant 0 : i32
    %c0_i32_0 = arith.constant 0 : i32
    %c0_i32_1 = arith.constant 0 : i32
    return %c0_i32, %c0_i32_0 : i32, i32
  }
  func.func @transform_6(%arg0: i32, %arg1: i32, %arg2: i32) -> (i32, i32) {
    %c0_i32 = arith.constant 0 : i32
    %c0_i32_0 = arith.constant 0 : i32
    %c0_i32_1 = arith.constant 0 : i32
    return %c0_i32, %c0_i32_0 : i32, i32
  }
  func.func @transform_7(%arg0: i32, %arg1: i32, %arg2: i32) -> (i32, i32) {
    %c0_i32 = arith.constant 0 : i32
    %c0_i32_0 = arith.constant 0 : i32
    %c0_i32_1 = arith.constant 0 : i32
    return %c0_i32, %c0_i32_0 : i32, i32
  }
  func.func @transform_8(%arg0: i32, %arg1: i32, %arg2: i32) -> (i32, i32) {
    %c0_i32 = arith.constant 0 : i32
    %c0_i32_0 = arith.constant 0 : i32
    %c0_i32_1 = arith.constant 0 : i32
    return %c0_i32, %c0_i32_0 : i32, i32
  }
  func.func @transform_9(%arg0: i32, %arg1: i32, %arg2: i32) -> (i32, i32) {
    %c0_i32 = arith.constant 0 : i32
    %c0_i32_0 = arith.constant 0 : i32
    %c0_i32_1 = arith.constant 0 : i32
    return %c0_i32, %c0_i32_0 : i32, i32
  }
  func.func @transform_10(%arg0: i32, %arg1: i32, %arg2: i32) -> (i32, i32, i32) {
    %c0_i32 = arith.constant 0 : i32
    return %arg0, %arg1, %arg2 : i32, i32, i32
  }
  func.func @transform_11(%arg0: i32, %arg1: i32, %arg2: i32) -> (i32, i32, i32) {
    %c0_i32 = arith.constant 0 : i32
    %c0_i32_0 = arith.constant 0 : i32
    return %arg0, %arg1, %c0_i32 : i32, i32, i32
  }
}

</mosaic_0001>

<llo_original>
// kernel: tpu_custom_call.1
$region0: #{tpu_custom_call.1}
  #allocation0 [shape = 'u32[]', space=smem, size = 0x4, offset = 0x4, fixed_abs, tag = 'smem constant byte address 0x4 - core index']
  #allocation1 [shape = 'u32[144,128]{1,0:T(1,128)}', space=vmem, size = 0x12000, scoped, tag = 'internal scratch']
  #allocation2 [shape = 'bf16[8,32]{1,0:T(8,128)(2,1)}', space=vmem, size = 0x800, scoped, tag = 'scratch operand']
  #allocation3 [shape = 'bf16[1,8,64]{2,1,0:T(8,128)(2,1)}', space=vmem, size = 0x800, scoped, tag = 'scratch operand']
  #allocation4 [shape = 'f32[4,8,1]{2,1,0:T(8,128)}', space=vmem, size = 0x4000, scoped, tag = 'scratch operand']
  #allocation5 [shape = 'f32[4,8,1]{2,1,0:T(8,128)}', space=vmem, size = 0x4000, scoped, tag = 'scratch operand']
  #allocation6 [shape = 'f32[4,8,8]{2,1,0:T(8,128)}', space=vmem, size = 0x4000, scoped, tag = 'scratch operand']
  #allocation7 [shape = 'f32[8,32]{1,0:T(8,128)}', space=vmem, size = 0x1000, scoped, tag = 'scratch operand']
  %s0 = inlined_call_operand.hbm [shape: f32[2,8,32], index: 0, kind: input, shape index: {}]
  %s1 = inlined_call_operand.hbm [shape: f32[2,8,32], index: 1, kind: input, shape index: {}]
  %s2 = inlined_call_operand.vmem [shape: f32[1,32], index: 2, kind: input, shape index: {}]
  %s3 = inlined_call_operand.vmem [shape: f32[1,32], index: 3, kind: input, shape index: {}]
  %s4 = inlined_call_operand.hbm [shape: bf16[32,32], index: 4, kind: input, shape index: {}]
  %s5 = inlined_call_operand.vmem [shape: f32[1,32], index: 5, kind: input, shape index: {}]
  %s6 = inlined_call_operand.hbm [shape: bf16[32,64], index: 6, kind: input, shape index: {}]
  %s7 = inlined_call_operand.vmem [shape: f32[1,64], index: 7, kind: input, shape index: {}]
  %s8 = inlined_call_operand.hbm [shape: bf16[32,32], index: 8, kind: input, shape index: {}]
  %s9 = inlined_call_operand.vmem [shape: f32[1,32], index: 9, kind: input, shape index: {}]
  %s10 = inlined_call_operand.vmem [shape: s8[2,8,8], index: 10, kind: input, shape index: {}]
  %s11 = inlined_call_operand.hbm [shape: f32[2,8,32], index: 11, kind: output, shape index: {}]
  %s12 = sld [smem:[#allocation0]]
  $region109: #{tpu_custom_call.1} parent=0
    _
  %s14 = ssub.s32 1, %s12
  %s15 = scalar_select 0, %s14, %s12
  $region1: #{tpu_custom_call.1} parent=0
    #allocation8 [shape = 'u8[8192]{0}', space=vmem, size = 0x2000, scoped, tag = 'input window, operand 0']
    #allocation9 [shape = 's32[2]{0}', space=sflag, size = 0x8, scoped, tag = 'scoped memory for tpu_custom_call.1']
    #allocation10 [shape = 's32[2]{0}', space=sflag, size = 0x8, scoped, tag = 'scoped memory for tpu_custom_call.1']
    #allocation11 [shape = 'u8[8192]{0}', space=vmem, size = 0x2000, scoped, tag = 'input window, operand 1']
    #allocation12 [shape = 's32[2]{0}', space=sflag, size = 0x8, scoped, tag = 'scoped memory for tpu_custom_call.1']
    #allocation13 [shape = 'u8[8192]{0}', space=vmem, size = 0x2000, scoped, tag = 'input window, operand 4, single buffered']
    #allocation14 [shape = 'u8[8192]{0}', space=vmem, size = 0x2000, scoped, tag = 'input window, operand 6, single buffered']
    #allocation15 [shape = 's32[1]{0}', space=sflag, size = 0x4, scoped, tag = 'scoped memory for tpu_custom_call.1']
    #allocation16 [shape = 'u8[8192]{0}', space=vmem, size = 0x2000, scoped, tag = 'input window, operand 8, single buffered']
    #allocation17 [shape = 'u8[8192]{0}', space=vmem, size = 0x2000, scoped, tag = 'output window, operand 0']
    %16 = vsyncpa [#allocation9], 0
    %s17 = scalar_lea.sflag [#allocation9], 1
    %18 = vsyncpa %s17, 0
    %19 = vsyncpa [#allocation12], 0
    %s20 = scalar_lea.sflag [#allocation12], 1
    %21 = vsyncpa %s20, 0
    %22 = vsyncpa [#allocation15], 0
    %23 = vsyncpa [#allocation10], 0
    %s24 = scalar_lea.sflag [#allocation10], 1
    %25 = vsyncpa %s24, 0
    loop: start=0, step=1, limit=4
    $region2: #{tpu_custom_call.1} parent=1 // loop_pre_header
      _
    $region3: #{tpu_custom_call.1} parent=1 // loop_header
      %s27 = sphi 0, %s31
      %p28 = scmp.ge.s32.totalorder %s27, 4
      %s34 = sphi 0, %s53
      %s35 = sphi 0, %s49
      %s36 = sphi 0, %s45
      %s37 = sphi 0, %s34
      %s38 = sphi 0, %s35
      %s39 = sphi 0, %s36
      %s40 = sphi 0, %s37
      %s41 = sphi 0, %s38
      %s42 = sphi 0, %s39
      %s58 = sphi 0, %s60
      %s61 = sphi 0, %s58
      %s62 = sphi 0, %s61
      %s78 = sphi 0, %s62
      %s86 = sphi 0, %s88
      %s89 = sphi 0, %s86
      %s90 = sphi 0, %s89
      %s106 = sphi 0, %s90
      %s110 = sphi 0, %s110
      %s112 = sphi 0, %s110
      %s113 = sphi 0, %s112
      %s127 = sphi 0, %s113
      %s131 = sphi 0, %s131
      %s133 = sphi 0, %s131
      %s134 = sphi 0, %s133
      %s148 = sphi 0, %s134
      %s152 = sphi 0, %s152
      %s154 = sphi 0, %s152
      %s155 = sphi 0, %s154
      %s169 = sphi 0, %s155
      %s173 = sphi 0, %s173
      %s175 = sphi 0, %s173
      %s176 = sphi 0, %s175
      %s190 = sphi 0, %s176
      %s194 = sphi 0, %s194
      %s196 = sphi 0, %s194
      %s197 = sphi 0, %s196
      %s211 = sphi 0, %s197
      %s215 = sphi 0, %s215
      %s217 = sphi 0, %s215
      %s218 = sphi 0, %s217
      %s232 = sphi 0, %s218
      %s236 = sphi 0, %s236
      %s238 = sphi 0, %s236
      %s239 = sphi 0, %s238
      %s253 = sphi 0, %s239
      %s257 = sphi 0, %s257
      %s259 = sphi 0, %s257
      %s260 = sphi 0, %s259
      %s274 = sphi 0, %s260
      %s284 = sphi 0, %s286
      %s287 = sphi 0, %s284
      %s288 = sphi 0, %s287
      %s304 = sphi 0, %s288
      %s312 = sphi 0, %s314
      %s315 = sphi 0, %s312
      %s316 = sphi 0, %s315
      %s332 = sphi 0, %s316
    $region4: #{tpu_custom_call.1} parent=1 // loop_header_branch
      %30 = sbr.rel (%p28) target = $region8
    $region5: #{tpu_custom_call.1} parent=1 // loop_body
      %s32 = ssub.s32 %s27, 1
      %s33 = ssub.s32 %s27, 2
      %s43 = sadd.s32 1, %s36
      %p44 = scmp.ge.s32.totalorder %s43, 1
      %s45 = scalar_select %p44, 0, %s43
      %s46 = sadd.s32 1, %s35
      %s47 = scalar_select %p44, %s46, %s35
      %p48 = scmp.ge.s32.totalorder %s47, 1
      %s49 = scalar_select %p48, 0, %s47
      %s50 = sadd.s32 1, %s34
      %s51 = scalar_select %p48, %s50, %s34
      %p52 = scmp.ge.s32.totalorder %s51, 2
      %s53 = scalar_select %p52, 0, %s51
      %s54 = ssub.s32 %s34, %s53
      %s55 = ssub.s32 %s35, %s49
      %s56 = sor.u32 %s54, %s55
      %p57 = scmp.eq.s32.totalorder %s56, 0
      %s59 = sadd.s32 %s58, 1
      %s60 = scalar_select %p57, %s58, %s59
      %p63 = pneg %p57
      %p64 = scmp.eq.s32.totalorder %s27, 1
      %p65 = por %p63, %p64
      %p66 = scmp.ne.s32.totalorder %s58, %s61
      %p67 = scmp.eq.s32.totalorder %s27, 0
      %p68 = por %p66, %p67
      %p69 = scmp.ne.s32.totalorder %s58, %s61
      %p70 = scmp.eq.s32.totalorder %s32, 1
      %p71 = por %p69, %p70
      %p72 = scmp.ne.s32.totalorder %s61, %s62
      %p73 = scmp.eq.s32.totalorder %s32, 0
      %p74 = por %p72, %p73
      %p75 = scmp.ne.s32.totalorder %s61, %s62
      %p76 = scmp.eq.s32.totalorder %s33, 1
      %p77 = por %p75, %p76
      %p79 = scmp.ne.s32.totalorder %s62, %s78
      %p80 = scmp.eq.s32.totalorder %s33, 0
      %p81 = por %p79, %p80
      %s82 = ssub.s32 %s34, %s53
      %s83 = ssub.s32 %s36, %s45
      %s84 = sor.u32 %s82, %s83
      %p85 = scmp.eq.s32.totalorder %s84, 0
      %s87 = sadd.s32 %s86, 1
      %s88 = scalar_select %p85, %s86, %s87
      %p91 = pneg %p85
      %p92 = scmp.eq.s32.totalorder %s27, 1
      %p93 = por %p91, %p92
      %p94 = scmp.ne.s32.totalorder %s86, %s89
      %p95 = scmp.eq.s32.totalorder %s27, 0
      %p96 = por %p94, %p95
      %p97 = scmp.ne.s32.totalorder %s86, %s89
      %p98 = scmp.eq.s32.totalorder %s32, 1
      %p99 = por %p97, %p98
      %p100 = scmp.ne.s32.totalorder %s89, %s90
      %p101 = scmp.eq.s32.totalorder %s32, 0
      %p102 = por %p100, %p101
      %p103 = scmp.ne.s32.totalorder %s89, %s90
      %p104 = scmp.eq.s32.totalorder %s33, 1
      %p105 = por %p103, %p104
      %p107 = scmp.ne.s32.totalorder %s90, %s106
      %p108 = scmp.eq.s32.totalorder %s33, 0
      %p109 = por %p107, %p108
      %s111 = sadd.s32 %s110, 1
      %p114 = scmp.eq.s32.totalorder %s27, 1
      %p115 = scmp.ne.s32.totalorder %s110, %s112
      %p116 = scmp.eq.s32.totalorder %s27, 0
      %p117 = por %p115, %p116
      %p118 = scmp.ne.s32.totalorder %s110, %s112
      %p119 = scmp.eq.s32.totalorder %s32, 1
      %p120 = por %p118, %p119
      %p121 = scmp.ne.s32.totalorder %s112, %s113
      %p122 = scmp.eq.s32.totalorder %s32, 0
      %p123 = por %p121, %p122
      %p124 = scmp.ne.s32.totalorder %s112, %s113
      %p125 = scmp.eq.s32.totalorder %s33, 1
      %p126 = por %p124, %p125
      %p128 = scmp.ne.s32.totalorder %s113, %s127
      %p129 = scmp.eq.s32.totalorder %s33, 0
      %p130 = por %p128, %p129
      %s132 = sadd.s32 %s131, 1
      %p135 = scmp.eq.s32.totalorder %s27, 1
      %p136 = scmp.ne.s32.totalorder %s131, %s133
      %p137 = scmp.eq.s32.totalorder %s27, 0
      %p138 = por %p136, %p137
      %p139 = scmp.ne.s32.totalorder %s131, %s133
      %p140 = scmp.eq.s32.totalorder %s32, 1
      %p141 = por %p139, %p140
      %p142 = scmp.ne.s32.totalorder %s133, %s134
      %p143 = scmp.eq.s32.totalorder %s32, 0
      %p144 = por %p142, %p143
      %p145 = scmp.ne.s32.totalorder %s133, %s134
      %p146 = scmp.eq.s32.totalorder %s33, 1
      %p147 = por %p145, %p146
      %p149 = scmp.ne.s32.totalorder %s134, %s148
      %p150 = scmp.eq.s32.totalorder %s33, 0
      %p151 = por %p149, %p150
      %s153 = sadd.s32 %s152, 1
      %p156 = scmp.eq.s32.totalorder %s27, 1
      %p157 = scmp.ne.s32.totalorder %s152, %s154
      %p158 = scmp.eq.s32.totalorder %s27, 0
      %p159 = por %p157, %p158
      %p160 = scmp.ne.s32.totalorder %s152, %s154
      %p161 = scmp.eq.s32.totalorder %s32, 1
      %p162 = por %p160, %p161
      %p163 = scmp.ne.s32.totalorder %s154, %s155
      %p164 = scmp.eq.s32.totalorder %s32, 0
      %p165 = por %p163, %p164
      %p166 = scmp.ne.s32.totalorder %s154, %s155
      %p167 = scmp.eq.s32.totalorder %s33, 1
      %p168 = por %p166, %p167
      %p170 = scmp.ne.s32.totalorder %s155, %s169
      %p171 = scmp.eq.s32.totalorder %s33, 0
      %p172 = por %p170, %p171
      %s174 = sadd.s32 %s173, 1
      %p177 = scmp.eq.s32.totalorder %s27, 1
      %p178 = scmp.ne.s32.totalorder %s173, %s175
      %p179 = scmp.eq.s32.totalorder %s27, 0
      %p180 = por %p178, %p179
      %p181 = scmp.ne.s32.totalorder %s173, %s175
      %p182 = scmp.eq.s32.totalorder %s32, 1
      %p183 = por %p181, %p182
      %p184 = scmp.ne.s32.totalorder %s175, %s176
      %p185 = scmp.eq.s32.totalorder %s32, 0
      %p186 = por %p184, %p185
      %p187 = scmp.ne.s32.totalorder %s175, %s176
      %p188 = scmp.eq.s32.totalorder %s33, 1
      %p189 = por %p187, %p188
      %p191 = scmp.ne.s32.totalorder %s176, %s190
      %p192 = scmp.eq.s32.totalorder %s33, 0
      %p193 = por %p191, %p192
      %s195 = sadd.s32 %s194, 1
      %p198 = scmp.eq.s32.totalorder %s27, 1
      %p199 = scmp.ne.s32.totalorder %s194, %s196
      %p200 = scmp.eq.s32.totalorder %s27, 0
      %p201 = por %p199, %p200
      %p202 = scmp.ne.s32.totalorder %s194, %s196
      %p203 = scmp.eq.s32.totalorder %s32, 1
      %p204 = por %p202, %p203
      %p205 = scmp.ne.s32.totalorder %s196, %s197
      %p206 = scmp.eq.s32.totalorder %s32, 0
      %p207 = por %p205, %p206
      %p208 = scmp.ne.s32.totalorder %s196, %s197
      %p209 = scmp.eq.s32.totalorder %s33, 1
      %p210 = por %p208, %p209
      %p212 = scmp.ne.s32.totalorder %s197, %s211
      %p213 = scmp.eq.s32.totalorder %s33, 0
      %p214 = por %p212, %p213
      %s216 = sadd.s32 %s215, 1
      %p219 = scmp.eq.s32.totalorder %s27, 1
      %p220 = scmp.ne.s32.totalorder %s215, %s217
      %p221 = scmp.eq.s32.totalorder %s27, 0
      %p222 = por %p220, %p221
      %p223 = scmp.ne.s32.totalorder %s215, %s217
      %p224 = scmp.eq.s32.totalorder %s32, 1
      %p225 = por %p223, %p224
      %p226 = scmp.ne.s32.totalorder %s217, %s218
      %p227 = scmp.eq.s32.totalorder %s32, 0
      %p228 = por %p226, %p227
      %p229 = scmp.ne.s32.totalorder %s217, %s218
      %p230 = scmp.eq.s32.totalorder %s33, 1
      %p231 = por %p229, %p230
      %p233 = scmp.ne.s32.totalorder %s218, %s232
      %p234 = scmp.eq.s32.totalorder %s33, 0
      %p235 = por %p233, %p234
      %s237 = sadd.s32 %s236, 1
      %p240 = scmp.eq.s32.totalorder %s27, 1
      %p241 = scmp.ne.s32.totalorder %s236, %s238
      %p242 = scmp.eq.s32.totalorder %s27, 0
      %p243 = por %p241, %p242
      %p244 = scmp.ne.s32.totalorder %s236, %s238
      %p245 = scmp.eq.s32.totalorder %s32, 1
      %p246 = por %p244, %p245
      %p247 = scmp.ne.s32.totalorder %s238, %s239
      %p248 = scmp.eq.s32.totalorder %s32, 0
      %p249 = por %p247, %p248
      %p250 = scmp.ne.s32.totalorder %s238, %s239
      %p251 = scmp.eq.s32.totalorder %s33, 1
      %p252 = por %p250, %p251
      %p254 = scmp.ne.s32.totalorder %s239, %s253
      %p255 = scmp.eq.s32.totalorder %s33, 0
      %p256 = por %p254, %p255
      %s258 = sadd.s32 %s257, 1
      %p261 = scmp.eq.s32.totalorder %s27, 1
      %p262 = scmp.ne.s32.totalorder %s257, %s259
      %p263 = scmp.eq.s32.totalorder %s27, 0
      %p264 = por %p262, %p263
      %p265 = scmp.ne.s32.totalorder %s257, %s259
      %p266 = scmp.eq.s32.totalorder %s32, 1
      %p267 = por %p265, %p266
      %p268 = scmp.ne.s32.totalorder %s259, %s260
      %p269 = scmp.eq.s32.totalorder %s32, 0
      %p270 = por %p268, %p269
      %p271 = scmp.ne.s32.totalorder %s259, %s260
      %p272 = scmp.eq.s32.totalorder %s33, 1
      %p273 = por %p271, %p272
      %p275 = scmp.ne.s32.totalorder %s260, %s274
      %p276 = scmp.eq.s32.totalorder %s33, 0
      %p277 = por %p275, %p276
      %s278 = ssub.s32 %s34, %s53
      %s279 = ssub.s32 %s35, %s49
      %s280 = sor.u32 %s278, %s279
      %s281 = ssub.s32 %s36, %s45
      %s282 = sor.u32 %s280, %s281
      %p283 = scmp.eq.s32.totalorder %s282, 0
      %s285 = sadd.s32 %s284, 1
      %s286 = scalar_select %p283, %s284, %s285
      %p289 = pneg %p283
      %p290 = scmp.eq.s32.totalorder %s27, 1
      %p291 = por %p289, %p290
      %p292 = scmp.ne.s32.totalorder %s284, %s287
      %p293 = scmp.eq.s32.totalorder %s27, 0
      %p294 = por %p292, %p293
      %p295 = scmp.ne.s32.totalorder %s284, %s287
      %p296 = scmp.eq.s32.totalorder %s32, 1
      %p297 = por %p295, %p296
      %p298 = scmp.ne.s32.totalorder %s287, %s288
      %p299 = scmp.eq.s32.totalorder %s32, 0
      %p300 = por %p298, %p299
      %p301 = scmp.ne.s32.totalorder %s287, %s288
      %p302 = scmp.eq.s32.totalorder %s33, 1
      %p303 = por %p301, %p302
      %p305 = scmp.ne.s32.totalorder %s288, %s304
      %p306 = scmp.eq.s32.totalorder %s33, 0
      %p307 = por %p305, %p306
      %s308 = ssub.s32 %s34, %s53
      %s309 = ssub.s32 %s35, %s49
      %s310 = sor.u32 %s308, %s309
      %p311 = scmp.eq.s32.totalorder %s310, 0
      %s313 = sadd.s32 %s312, 1
      %s314 = scalar_select %p311, %s312, %s313
      %p317 = pneg %p311
      %p318 = scmp.eq.s32.totalorder %s27, 1
      %p319 = por %p317, %p318
      %p320 = scmp.ne.s32.totalorder %s312, %s315
      %p321 = scmp.eq.s32.totalorder %s27, 0
      %p322 = por %p320, %p321
      %p323 = scmp.ne.s32.totalorder %s312, %s315
      %p324 = scmp.eq.s32.totalorder %s32, 1
      %p325 = por %p323, %p324
      %p326 = scmp.ne.s32.totalorder %s315, %s316
      %p327 = scmp.eq.s32.totalorder %s32, 0
      %p328 = por %p326, %p327
      %p329 = scmp.ne.s32.totalorder %s315, %s316
      %p330 = scmp.eq.s32.totalorder %s33, 1
      %p331 = por %p329, %p330
      %p333 = scmp.ne.s32.totalorder %s316, %s332
      %p334 = scmp.eq.s32.totalorder %s33, 0
      %p335 = por %p333, %p334
      %p336 = scmp.le.s32.totalorder 1, %s27
      %p337 = scmp.lt.s32.totalorder %s27, 3
      %p338 = pnand %p336, %p337
      %p339 = pneg %p338
      // Predicated region
      $region9: #{tpu_custom_call.1} parent=5 // pred_check
        _
      $region10: #{tpu_custom_call.1} parent=5 // pred_check_branch
        %341 = sbr.rel (%p338) target = $region12
      $region11: #{tpu_custom_call.1} parent=5 // pred_region
        %s342 = ssub.s32 %s27, 1
        // Predicated region
        $region13: #{tpu_custom_call.1} parent=11 // pred_check
          %p343 = pneg %p123
        $region14: #{tpu_custom_call.1} parent=11 // pred_check_branch
          %345 = sbr.rel (%p343) target = $region16
        $region15: #{tpu_custom_call.1} parent=11 // pred_region
          _
        $region16: #{tpu_custom_call.1} parent=11 // pred_fallthru
          _
        // Predicated region
        $region17: #{tpu_custom_call.1} parent=11 // pred_check
          %p346 = pneg %p144
        $region18: #{tpu_custom_call.1} parent=11 // pred_check_branch
          %348 = sbr.rel (%p346) target = $region20
        $region19: #{tpu_custom_call.1} parent=11 // pred_region
          _
        $region20: #{tpu_custom_call.1} parent=11 // pred_fallthru
          _
        // Predicated region
        $region21: #{tpu_custom_call.1} parent=11 // pred_check
          %p349 = pneg %p165
        $region22: #{tpu_custom_call.1} parent=11 // pred_check_branch
          %351 = sbr.rel (%p349) target = $region24
        $region23: #{tpu_custom_call.1} parent=11 // pred_region
          %s353 = ssub.s32 256, 256
          %354 = vsyncadd [#allocation12], %s353
          %s355 = sshll.u32 [#allocation13], 4
          %s356 = int_to_ptr.vmem [resolvable:$true] %s355
          %361 = dma.hbm_to_vmem [thread:$0]  %s4, 256, %s356, [#allocation12], 64, 64, 4
        $region24: #{tpu_custom_call.1} parent=11 // pred_fallthru
          _
        // Predicated region
        $region25: #{tpu_custom_call.1} parent=11 // pred_check
          %p362 = pneg %p186
        $region26: #{tpu_custom_call.1} parent=11 // pred_check_branch
          %364 = sbr.rel (%p362) target = $region28
        $region27: #{tpu_custom_call.1} parent=11 // pred_region
          _
        $region28: #{tpu_custom_call.1} parent=11 // pred_fallthru
          _
        // Predicated region
        $region29: #{tpu_custom_call.1} parent=11 // pred_check
          %p365 = pneg %p207
        $region30: #{tpu_custom_call.1} parent=11 // pred_check_branch
          %367 = sbr.rel (%p365) target = $region32
        $region31: #{tpu_custom_call.1} parent=11 // pred_region
          %s369 = ssub.s32 256, 256
          %370 = vsyncadd [#allocation15], %s369
          %s371 = sshll.u32 [#allocation14], 4
          %s372 = int_to_ptr.vmem [resolvable:$true] %s371
          %377 = dma.hbm_to_vmem [thread:$0]  %s6, 256, %s372, [#allocation15], 64, 64, 4
        $region32: #{tpu_custom_call.1} parent=11 // pred_fallthru
          _
        // Predicated region
        $region33: #{tpu_custom_call.1} parent=11 // pred_check
          %p378 = pneg %p228
        $region34: #{tpu_custom_call.1} parent=11 // pred_check_branch
          %380 = sbr.rel (%p378) target = $region36
        $region35: #{tpu_custom_call.1} parent=11 // pred_region
          _
        $region36: #{tpu_custom_call.1} parent=11 // pred_fallthru
          _
        // Predicated region
        $region37: #{tpu_custom_call.1} parent=11 // pred_check
          %p381 = pneg %p249
        $region38: #{tpu_custom_call.1} parent=11 // pred_check_branch
          %383 = sbr.rel (%p381) target = $region40
        $region39: #{tpu_custom_call.1} parent=11 // pred_region
          %s385 = ssub.s32 256, 256
          %386 = vsyncadd [#allocation15], %s385
          %s387 = sshll.u32 [#allocation16], 4
          %s388 = int_to_ptr.vmem [resolvable:$true] %s387
          %393 = dma.hbm_to_vmem [thread:$0]  %s8, 256, %s388, [#allocation15], 64, 64, 4
        $region40: #{tpu_custom_call.1} parent=11 // pred_fallthru
          _
        // Predicated region
        $region41: #{tpu_custom_call.1} parent=11 // pred_check
          %p394 = pneg %p270
        $region42: #{tpu_custom_call.1} parent=11 // pred_check_branch
          %396 = sbr.rel (%p394) target = $region44
        $region43: #{tpu_custom_call.1} parent=11 // pred_region
          _
        $region44: #{tpu_custom_call.1} parent=11 // pred_fallthru
          _
      $region12: #{tpu_custom_call.1} parent=5 // pred_fallthru
        _
      %p397 = scmp.lt.s32.totalorder %s27, 2
      // Predicated region
      $region45: #{tpu_custom_call.1} parent=5 // pred_check
        %p398 = pneg %p397
      $region46: #{tpu_custom_call.1} parent=5 // pred_check_branch
        %400 = sbr.rel (%p398) target = $region48
      $region47: #{tpu_custom_call.1} parent=5 // pred_region
        // Predicated region
        $region49: #{tpu_custom_call.1} parent=47 // pred_check
          %p401 = pneg %p68
        $region50: #{tpu_custom_call.1} parent=47 // pred_check_branch
          %403 = sbr.rel (%p401) target = $region52
        $region51: #{tpu_custom_call.1} parent=47 // pred_region
          %s404 = sand.u32 %s58, 1
          %s405 = scalar_lea.sflag [#allocation9], %s404
          %s406 = sand.u32 %s58, 1
          %s407 = smul.addr %s406, 8
          %s408 = scalar_lea.vmem [#allocation8], %s407
          %s410 = ssub.s32 128, 128
          %411 = vsyncadd %s405, %s410
          %s412 = sadd.s32 %s35, %s34
          %s413 = smul.addr %s412, 128
          %s414 = scalar_lea.hbm %s0, %s413
          %s416 = sshll.u32 %s408, 4
          %s417 = int_to_ptr.vmem [resolvable:$true] %s416
          %419 = dma.hbm_to_vmem [thread:$0]  %s414, 128, %s417, %s405
        $region52: #{tpu_custom_call.1} parent=47 // pred_fallthru
          _
        // Predicated region
        $region53: #{tpu_custom_call.1} parent=47 // pred_check
          %p420 = pneg %p96
        $region54: #{tpu_custom_call.1} parent=47 // pred_check_branch
          %422 = sbr.rel (%p420) target = $region56
        $region55: #{tpu_custom_call.1} parent=47 // pred_region
          %s423 = sand.u32 %s27, 1
          %s424 = scalar_lea.sflag [#allocation12], %s423
          %s425 = sand.u32 %s86, 1
          %s426 = smul.addr %s425, 8
          %s427 = scalar_lea.vmem [#allocation11], %s426
          %s429 = ssub.s32 128, 128
          %430 = vsyncadd %s424, %s429
          %s431 = sadd.s32 %s36, %s34
          %s432 = smul.addr %s431, 128
          %s433 = scalar_lea.hbm %s1, %s432
          %s435 = sshll.u32 %s427, 4
          %s436 = int_to_ptr.vmem [resolvable:$true] %s435
          %438 = dma.hbm_to_vmem [thread:$0]  %s433, 128, %s436, %s424
        $region56: #{tpu_custom_call.1} parent=47 // pred_fallthru
          _
        // Predicated region
        $region57: #{tpu_custom_call.1} parent=47 // pred_check
          %p439 = pneg %p294
        $region58: #{tpu_custom_call.1} parent=47 // pred_check_branch
          %441 = sbr.rel (%p439) target = $region60
        $region59: #{tpu_custom_call.1} parent=47 // pred_region
          %p442 = scmp.lt.s32.totalorder %s34, 1
          %s443 = scalar_select %p442, %s34, 1
          %p444 = scmp.lt.s32.totalorder %s35, 0
          %s445 = scalar_select %p444, %s35, 0
          %p446 = scmp.lt.s32.totalorder %s36, 0
          %s447 = scalar_select %p446, %s36, 0
          %s448 = sadd.s32 %s447, %s445
          %s449 = sadd.s32 %s448, %s443
          %s450 = smul.addr %s449, 2
          %s451 = scalar_lea.vmem %s10, %s450
        $region60: #{tpu_custom_call.1} parent=47 // pred_fallthru
          _
      $region48: #{tpu_custom_call.1} parent=5 // pred_fallthru
        _
      %p452 = scmp.le.s32.totalorder 1, %s27
      %p453 = scmp.lt.s32.totalorder %s27, 3
      %p454 = pnand %p452, %p453
      %p455 = pneg %p454
      // Predicated region
      $region61: #{tpu_custom_call.1} parent=5 // pred_check
        _
      $region62: #{tpu_custom_call.1} parent=5 // pred_check_branch
        %457 = sbr.rel (%p454) target = $region64
      $region63: #{tpu_custom_call.1} parent=5 // pred_region
        %s458 = ssub.s32 %s27, 1
        %s459 = sand.u32 %s61, 1
        %s460 = scalar_lea.sflag [#allocation9], %s459
        %s461 = sand.u32 %s61, 1
        %s462 = smul.addr %s461, 8
        %s463 = scalar_lea.vmem [#allocation8], %s462
        // Predicated region
        $region65: #{tpu_custom_call.1} parent=63 // pred_check
          %p464 = pneg %p74
        $region66: #{tpu_custom_call.1} parent=63 // pred_check_branch
          %466 = sbr.rel (%p464) target = $region68
        $region67: #{tpu_custom_call.1} parent=63 // pred_region
          %467 = dma.done %s460, 128
        $region68: #{tpu_custom_call.1} parent=63 // pred_fallthru
          _
        %s468 = sand.u32 %s32, 1
        %s469 = scalar_lea.sflag [#allocation12], %s468
        %s470 = sand.u32 %s89, 1
        %s471 = smul.addr %s470, 8
        %s472 = scalar_lea.vmem [#allocation11], %s471
        // Predicated region
        $region69: #{tpu_custom_call.1} parent=63 // pred_check
          %p473 = pneg %p102
        $region70: #{tpu_custom_call.1} parent=63 // pred_check_branch
          %475 = sbr.rel (%p473) target = $region72
        $region71: #{tpu_custom_call.1} parent=63 // pred_region
          %476 = dma.done %s469, 128
        $region72: #{tpu_custom_call.1} parent=63 // pred_fallthru
          _
        // Predicated region
        $region73: #{tpu_custom_call.1} parent=63 // pred_check
          %p477 = pneg %p165
        $region74: #{tpu_custom_call.1} parent=63 // pred_check_branch
          %479 = sbr.rel (%p477) target = $region76
        $region75: #{tpu_custom_call.1} parent=63 // pred_region
          %480 = dma.done [#allocation12], 256
        $region76: #{tpu_custom_call.1} parent=63 // pred_fallthru
          _
        // Predicated region
        $region77: #{tpu_custom_call.1} parent=63 // pred_check
          %p481 = pneg %p207
        $region78: #{tpu_custom_call.1} parent=63 // pred_check_branch
          %483 = sbr.rel (%p481) target = $region80
        $region79: #{tpu_custom_call.1} parent=63 // pred_region
          %484 = dma.done [#allocation15], 256
        $region80: #{tpu_custom_call.1} parent=63 // pred_fallthru
          _
        // Predicated region
        $region81: #{tpu_custom_call.1} parent=63 // pred_check
          %p485 = pneg %p249
        $region82: #{tpu_custom_call.1} parent=63 // pred_check_branch
          %487 = sbr.rel (%p485) target = $region84
        $region83: #{tpu_custom_call.1} parent=63 // pred_region
          %488 = dma.done [#allocation15], 256
        $region84: #{tpu_custom_call.1} parent=63 // pred_fallthru
          _
        %s489 = sand.u32 %s61, 1
        %s490 = scalar_lea.sflag [#allocation9], %s489
        %s491 = sand.u32 %s61, 1
        %s492 = smul.addr %s491, 8
        %s493 = scalar_lea.vmem [#allocation8], %s492
        %p494 = pneg %p74
        %p495 = pneg %p71
        %s496 = sand.u32 %s32, 1
        %s497 = scalar_lea.sflag [#allocation12], %s496
        %s498 = sand.u32 %s89, 1
        %s499 = smul.addr %s498, 8
        %s500 = scalar_lea.vmem [#allocation11], %s499
        %p501 = pneg %p102
        %p502 = pneg %p99
        %p503 = pneg %p123
        %p504 = pneg %p120
        %p505 = pneg %p144
        %p506 = pneg %p141
        %p507 = pneg %p165
        %p508 = pneg %p162
        %p509 = pneg %p186
        %p510 = pneg %p183
        %p511 = pneg %p207
        %p512 = pneg %p204
        %p513 = pneg %p228
        %p514 = pneg %p225
        %p515 = pneg %p249
        %p516 = pneg %p246
        %p517 = pneg %p270
        %p518 = pneg %p267
        %p519 = scmp.lt.s32.totalorder %s37, 1
        %s520 = scalar_select %p519, %s37, 1
        %p521 = scmp.lt.s32.totalorder %s38, 0
        %s522 = scalar_select %p521, %s38, 0
        %p523 = scmp.lt.s32.totalorder %s39, 0
        %s524 = scalar_select %p523, %s39, 0
        %s525 = sadd.s32 %s524, %s522
        %s526 = sadd.s32 %s525, %s520
        %s527 = smul.addr %s526, 2
        %s528 = scalar_lea.vmem %s10, %s527
        %p529 = pneg %p300
        %p530 = pneg %p297
        %p531 = pneg %p328
        %p532 = pneg %p325
        %s533 = sand.u32 %s315, 1
        %s534 = scalar_lea.sflag [#allocation10], %s533
        %s535 = sand.u32 %s315, 1
        %s536 = smul.addr %s535, 8
        %s537 = scalar_lea.vmem [#allocation17], %s536
        %p538 = scmp.lt.s32.totalorder %s37, 1
        %s539 = scalar_select %p538, %s37, 1
        %p540 = scmp.lt.s32.totalorder %s38, 0
        %s541 = scalar_select %p540, %s38, 0
        %p542 = scmp.lt.s32.totalorder %s39, 0
        %s543 = scalar_select %p542, %s39, 0
        %s544 = sadd.s32 %s543, %s541
        %s545 = sadd.s32 %s544, %s539
        %s546 = smul.addr %s545, 2
        %s547 = scalar_lea.vmem %s10, %s546
        %p551 = scmp.eq.s32.totalorder %s38, 0
        // Predicated region
        $region85: #{tpu_custom_call.1} parent=63 // pred_check
          %p552 = pneg %p551
        $region86: #{tpu_custom_call.1} parent=63 // pred_check_branch
          %554 = sbr.rel (%p552) target = $region88
        $region87: #{tpu_custom_call.1} parent=63 // pred_region
          %v555 = vld [vmem:[%s472] sm:$0xff]
          %v556 = vld [vmem:[%s2] sm:$0x1]
          %v557 = vld [vmem:[%s3] sm:$0x1]
          %vm558 = vcmask 261120
          %v559 = vsel %vm558, %v555, 0.0
          %560 = vadd.xlane.f32.xlu0 %v559
          %v561 = vpop.xlane.xlu0 %560
          %v562 = vrcp.pop 32.0
          %v563 = vmul.f32 %v561, %v562
          %v564 = vsub.f32 %v555, %v563
          %v565 = vmul.f32 %v564, %v564
          %v566 = vsel %vm558, %v565, 0.0
          %567 = vadd.xlane.f32.xlu0 %v566
          %v568 = vpop.xlane.xlu0 %567
          %v569 = vmul.f32 %v568, %v562
          %v570 = vadd.f32 %v569, 1e-06
          %v571 = vrsqrt.pop %v570
          %v572 = vmul.f32 %v564, %v571
          %v574 = vlaneseq
          %v575 = vshrl.u32 %v574, 7
          %v576 = vsub.s32 0, %v575
          %v577 = vrot.slane %v556, %v576
          %v579 = vmul.f32 %v572, %v577
          %v581 = vlaneseq
          %v582 = vshrl.u32 %v581, 7
          %v583 = vsub.s32 0, %v582
          %v584 = vrot.slane %v557, %v583
          %v586 = vadd.f32 %v579, %v584
          %v587 = vpack.c.bf16 %v586, %v586
          %v588 = vld [vmem:[#allocation14] sm:$0xf]
          %v589 = vld [vmem:[#allocation14 + $0x4] sm:$0xf]
          %v590 = vld [vmem:[#allocation14 + $0x8] sm:$0xf]
          %v591 = vld [vmem:[#allocation14 + $0xc] sm:$0xf]
          %v592 = vld [vmem:[%s7] sm:$0x1]
          %v594 = vlaneseq
          %v595 = vshrl.u32 %v594, 7
          %v596 = vsub.s32 0, %v595
          %v597 = vrot.slane %v592, %v596
          %v603 = vunpack.c.l.b16 %v588
          %v604 = vunpack.c.l.b16 %v589
          %v605 = vunpack.c.l.b16 %v590
          %v606 = vunpack.c.l.b16 %v591
          %v607 = vpack.c.b16 %v604, %v603
          %v608 = vpack.c.b16 %v606, %v605
          %v612 = vsel %vm558, %v587, 0
          %614 = vmatprep.subr.bf16.mxu0 0
          %615 = vmatpush1.bf16.msra.mxu0 0
          %616 = vmatprep.subr.bf16.mxu0 0
          %617 = vmatpush1.bf16.msra.mxu0 0
          %618 = vmatprep.subr.bf16.mxu0 0
          %619 = vmatpush1.bf16.msra.mxu0 0
          %620 = vmatprep.subr.bf16.mxu0 0
          %621 = vmatpush1.bf16.msra.mxu0 0
          %622 = vmatprep.subr.bf16.mxu0 0
          %623 = vmatpush1.bf16.msra.mxu0 0
          %624 = vmatprep.subr.bf16.mxu0 0
          %625 = vmatpush1.bf16.msra.mxu0 0
          %626 = vmatprep.subr.bf16.mxu0 0
          %627 = vmatpush1.bf16.msra.mxu0 %v608
          %628 = vmatprep.subr.bf16.mxu0 0
          %629 = vmatpush1.bf16.msra.mxu0 %v607
          %630 = vmatprep.subr.bf16.mxu0 0
          %631 = vmatpush2.bf16.msra.mxu0 0
          %632 = vmatprep.subr.bf16.mxu0 0
          %633 = vmatpush2.bf16.msra.mxu0 0
          %634 = vmatprep.subr.bf16.mxu0 0
          %635 = vmatpush2.bf16.msra.mxu0 0
          %636 = vmatprep.subr.bf16.mxu0 0
          %637 = vmatpush2.bf16.msra.mxu0 0
          %638 = vmatprep.subr.bf16.mxu0 0
          %639 = vmatpush2.bf16.msra.mxu0 0
          %640 = vmatprep.subr.bf16.mxu0 0
          %641 = vmatpush2.bf16.msra.mxu0 0
          %642 = vmatprep.subr.bf16.mxu0 0
          %643 = vmatpush2.bf16.msra.mxu0 0
          %644 = vmatprep.subr.bf16.mxu0 0
          %645 = vmatpush2.bf16.msra.mxu0 0
          %646 = vmatprep.mubr.bf16.mxu0 0
          %647 = vmatmul.mubr.bf16.gmra.mxu0 %v612
          %v648 = vpop.f32.mrf.mxu0
          %v649 = vadd.f32 %v597, %v648
          %v650 = vpop.f32.mrf.mxu0
          %v651 = vpop.f32.mrf.mxu0
          %v652 = vpop.f32.mrf.mxu0
          %653 = vdwg.mxu0
          %v654 = vpack.c.bf16 %v649, %v649
          %s655 = smul.addr %s39, 4
          %s656 = scalar_lea.vmem [#allocation3], %s655
          %vm657 = vcmask 519168
          %658 = vst.msk [vmem:[%s656] sm:$0xf] %vm657, %v654
        $region88: #{tpu_custom_call.1} parent=63 // pred_fallthru
          _
        %p659 = scmp.eq.s32.totalorder %s39, 0
        // Predicated region
        $region89: #{tpu_custom_call.1} parent=63 // pred_check
          %p660 = pneg %p659
        $region90: #{tpu_custom_call.1} parent=63 // pred_check_branch
          %662 = sbr.rel (%p660) target = $region92
        $region91: #{tpu_custom_call.1} parent=63 // pred_region
          %v663 = vld [vmem:[%s463] sm:$0xff]
          %v664 = vld [vmem:[%s2] sm:$0x1]
          %v665 = vld [vmem:[%s3] sm:$0x1]
          %vm666 = vcmask 261120
          %v667 = vsel %vm666, %v663, 0.0
          %668 = vadd.xlane.f32.xlu0 %v667
          %v669 = vpop.xlane.xlu0 %668
          %v670 = vrcp.pop 32.0
          %v671 = vmul.f32 %v669, %v670
          %v672 = vsub.f32 %v663, %v671
          %v673 = vmul.f32 %v672, %v672
          %v674 = vsel %vm666, %v673, 0.0
          %675 = vadd.xlane.f32.xlu0 %v674
          %v676 = vpop.xlane.xlu0 %675
          %v677 = vmul.f32 %v676, %v670
          %v678 = vadd.f32 %v677, 1e-06
          %v679 = vrsqrt.pop %v678
          %v680 = vmul.f32 %v672, %v679
          %v682 = vlaneseq
          %v683 = vshrl.u32 %v682, 7
          %v684 = vsub.s32 0, %v683
          %v685 = vrot.slane %v664, %v684
          %v687 = vmul.f32 %v680, %v685
          %v689 = vlaneseq
          %v690 = vshrl.u32 %v689, 7
          %v691 = vsub.s32 0, %v690
          %v692 = vrot.slane %v665, %v691
          %v694 = vadd.f32 %v687, %v692
          %v695 = vpack.c.bf16 %v694, %v694
          %v696 = vld [vmem:[#allocation13] sm:$0xf]
          %v697 = vld [vmem:[#allocation13 + $0x4] sm:$0xf]
          %v698 = vld [vmem:[#allocation13 + $0x8] sm:$0xf]
          %v699 = vld [vmem:[#allocation13 + $0xc] sm:$0xf]
          %v700 = vld [vmem:[%s5] sm:$0x1]
          %v702 = vlaneseq
          %v703 = vshrl.u32 %v702, 7
          %v704 = vsub.s32 0, %v703
          %v705 = vrot.slane %v700, %v704
          %v711 = vunpack.c.l.b16 %v696
          %v712 = vunpack.c.l.b16 %v697
          %v713 = vunpack.c.l.b16 %v698
          %v714 = vunpack.c.l.b16 %v699
          %v715 = vpack.c.b16 %v712, %v711
          %v716 = vpack.c.b16 %v714, %v713
          %v720 = vsel %vm666, %v695, 0
          %722 = vmatprep.subr.bf16.mxu0 0
          %723 = vmatpush1.bf16.msra.mxu0 0
          %724 = vmatprep.subr.bf16.mxu0 0
          %725 = vmatpush1.bf16.msra.mxu0 0
          %726 = vmatprep.subr.bf16.mxu0 0
          %727 = vmatpush1.bf16.msra.mxu0 0
          %728 = vmatprep.subr.bf16.mxu0 0
          %729 = vmatpush1.bf16.msra.mxu0 0
          %730 = vmatprep.subr.bf16.mxu0 0
          %731 = vmatpush1.bf16.msra.mxu0 0
          %732 = vmatprep.subr.bf16.mxu0 0
          %733 = vmatpush1.bf16.msra.mxu0 0
          %734 = vmatprep.subr.bf16.mxu0 0
          %735 = vmatpush1.bf16.msra.mxu0 %v716
          %736 = vmatprep.subr.bf16.mxu0 0
          %737 = vmatpush1.bf16.msra.mxu0 %v715
          %738 = vmatprep.subr.bf16.mxu0 0
          %739 = vmatpush2.bf16.msra.mxu0 0
          %740 = vmatprep.subr.bf16.mxu0 0
          %741 = vmatpush2.bf16.msra.mxu0 0
          %742 = vmatprep.subr.bf16.mxu0 0
          %743 = vmatpush2.bf16.msra.mxu0 0
          %744 = vmatprep.subr.bf16.mxu0 0
          %745 = vmatpush2.bf16.msra.mxu0 0
          %746 = vmatprep.subr.bf16.mxu0 0
          %747 = vmatpush2.bf16.msra.mxu0 0
          %748 = vmatprep.subr.bf16.mxu0 0
          %749 = vmatpush2.bf16.msra.mxu0 0
          %750 = vmatprep.subr.bf16.mxu0 0
          %751 = vmatpush2.bf16.msra.mxu0 0
          %752 = vmatprep.subr.bf16.mxu0 0
          %753 = vmatpush2.bf16.msra.mxu0 0
          %754 = vmatprep.mubr.bf16.mxu0 0
          %755 = vmatmul.mubr.bf16.gmra.mxu0 %v720
          %v756 = vpop.f32.mrf.mxu0
          %v757 = vadd.f32 %v705, %v756
          %v758 = vpop.f32.mrf.mxu0
          %v759 = vpop.f32.mrf.mxu0
          %v760 = vpop.f32.mrf.mxu0
          %761 = vdwg.mxu0
          %v762 = vpack.c.bf16 %v757, %v757
          %vm763 = vcmask 257024
          %764 = vst.msk [vmem:[#allocation2] sm:$0xf] %vm763, %v762
          %vm765 = vcmask 7168
          %766 = vst.msk [vmem:[#allocation4] sm:$0xff] %vm765, -inf
          %767 = vst.msk [vmem:[#allocation4 + $0x8] sm:$0xff] %vm765, -inf
          %768 = vst.msk [vmem:[#allocation4 + $0x10] sm:$0xff] %vm765, -inf
          %769 = vst.msk [vmem:[#allocation4 + $0x18] sm:$0xff] %vm765, -inf
          %770 = vst.msk [vmem:[#allocation5] sm:$0xff] %vm765, 0.0
          %771 = vst.msk [vmem:[#allocation5 + $0x8] sm:$0xff] %vm765, 0.0
          %772 = vst.msk [vmem:[#allocation5 + $0x10] sm:$0xff] %vm765, 0.0
          %773 = vst.msk [vmem:[#allocation5 + $0x18] sm:$0xff] %vm765, 0.0
          %vm774 = vcmask 64512
          %775 = vst.msk [vmem:[#allocation6] sm:$0xff] %vm774, 0.0
          %776 = vst.msk [vmem:[#allocation6 + $0x8] sm:$0xff] %vm774, 0.0
          %777 = vst.msk [vmem:[#allocation6 + $0x10] sm:$0xff] %vm774, 0.0
          %778 = vst.msk [vmem:[#allocation6 + $0x18] sm:$0xff] %vm774, 0.0
        $region92: #{tpu_custom_call.1} parent=63 // pred_fallthru
          _
        %v779 = vld [vmem:[#allocation2] sm:$0xf]
        %s780 = smul.addr %s39, 4
        %s781 = scalar_lea.vmem [#allocation3], %s780
        %v782 = vld [vmem:[%s781] sm:$0xf]
        %v783 = vld [vmem:[%s547] sm:$0x3]
        %vm784 = vnez %v783
        %vm785 = vcmask 64512
        %v787 = vsel %vm785, %v779, 0
        %v790 = vsel %vm785, %v782, 0
        %792 = vmatprep.subr.bf16.mxu0 0
        %793 = vmatpush1.bf16.xpose.msra.mxu0 0
        %794 = vmatprep.subr.bf16.mxu0 0
        %795 = vmatpush1.bf16.xpose.msra.mxu0 0
        %796 = vmatprep.subr.bf16.mxu0 0
        %797 = vmatpush1.bf16.xpose.msra.mxu0 0
        %798 = vmatprep.subr.bf16.mxu0 0
        %799 = vmatpush1.bf16.xpose.msra.mxu0 0
        %800 = vmatprep.subr.bf16.mxu0 0
        %801 = vmatpush1.bf16.xpose.msra.mxu0 0
        %802 = vmatprep.subr.bf16.mxu0 0
        %803 = vmatpush1.bf16.xpose.msra.mxu0 0
        %804 = vmatprep.subr.bf16.mxu0 0
        %805 = vmatpush1.bf16.xpose.msra.mxu0 0
        %806 = vmatprep.subr.bf16.mxu0 0
        %807 = vmatpush1.bf16.xpose.msra.mxu0 %v790
        %808 = vmatprep.subr.bf16.mxu0 0
        %809 = vmatpush2.bf16.xpose.msra.mxu0 0
        %810 = vmatprep.subr.bf16.mxu0 0
        %811 = vmatpush2.bf16.xpose.msra.mxu0 0
        %812 = vmatprep.subr.bf16.mxu0 0
        %813 = vmatpush2.bf16.xpose.msra.mxu0 0
        %814 = vmatprep.subr.bf16.mxu0 0
        %815 = vmatpush2.bf16.xpose.msra.mxu0 0
        %816 = vmatprep.subr.bf16.mxu0 0
        %817 = vmatpush2.bf16.xpose.msra.mxu0 0
        %818 = vmatprep.subr.bf16.mxu0 0
        %819 = vmatpush2.bf16.xpose.msra.mxu0 0
        %820 = vmatprep.subr.bf16.mxu0 0
        %821 = vmatpush2.bf16.xpose.msra.mxu0 0
        %822 = vmatprep.subr.bf16.mxu0 0
        %823 = vmatpush2.bf16.xpose.msra.mxu0 0
        %824 = vmatprep.mubr.bf16.mxu0 0
        %825 = vmatmul.mubr.bf16.gmra.mxu0 %v787
        %v826 = vpop.f32.mrf.mxu0
        %v827 = vadd.f32 0.0, %v826
        %v828 = vpop.f32.mrf.mxu0
        %v829 = vpop.f32.mrf.mxu0
        %v830 = vpop.f32.mrf.mxu0
        %831 = vdwg.mxu0
        %v832 = vmul.f32 %v827, 0.35355338
        %v833 = vsel %vm784, 16843009, 0
        %v834 = vunpack.c.0.s8 %v833
        %vm835 = vcmp.ne.s32.totalorder %v834, 0
        %v836 = vsel %vm835, %v832, -1e+09
        %v837 = vld [vmem:[#allocation4] sm:$0xff]
        %v838 = vsel %vm785, %v836, -inf
        %839 = vmax.xlane.f32.xlu0 %v838
        %v840 = vpop.xlane.xlu0 %839
        %v841 = vmax.f32 %v837, %v840
        %v842 = vsub.f32 %v837, %v841
        %v843 = vmul.f32 %v842, 1.442695
        %v844 = vpow.pop %v843
        %846 = vset.pattern.permute.xlu0 0
        %847 = vperm.xlu0 %846, %v841
        %v848 = vpop.permute.xlu0 %847
        %v850 = vsub.f32 %v836, %v848
        %v851 = vmul.f32 %v850, 1.442695
        %v852 = vpow.pop %v851
        %v853 = vld [vmem:[#allocation5] sm:$0xff]
        %v854 = vmul.f32 %v844, %v853
        %v855 = vsel %vm785, %v852, 0.0
        %856 = vadd.xlane.f32.xlu0 %v855
        %v857 = vpop.xlane.xlu0 %856
        %v858 = vadd.f32 %v854, %v857
        %vm859 = vcmask 7168
        %860 = vst.msk [vmem:[#allocation5] sm:$0xff] %vm859, %v858
        %v861 = vld [vmem:[#allocation6] sm:$0xff]
        %863 = vset.pattern.permute.xlu0 0
        %864 = vperm.xlu0 %863, %v844
        %v865 = vpop.permute.xlu0 %864
        %v867 = vmul.f32 %v865, %v861
        %v868 = vpack.c.bf16 %v852, %v852
        %v870 = vunpack.c.l.b16 %v782
        %v871 = vpack.c.b16 %v870, %v870
        %872 = vrot.lane.b32.xlu0 %v871, 96
        %v873 = vpop.permute.xlu0 %872
        %v875 = vsel %vm785, %v868, 0
        %vm877 = vcmask 1043456
        %v879 = vsel %vm877, %v873, 0
        %881 = vmatprep.subr.bf16.mxu0 0
        %882 = vmatpush1.bf16.msra.mxu0 0
        %883 = vmatprep.subr.bf16.mxu0 0
        %884 = vmatpush1.bf16.msra.mxu0 0
        %885 = vmatprep.subr.bf16.mxu0 0
        %886 = vmatpush1.bf16.msra.mxu0 0
        %887 = vmatprep.subr.bf16.mxu0 0
        %888 = vmatpush1.bf16.msra.mxu0 0
        %889 = vmatprep.subr.bf16.mxu0 0
        %890 = vmatpush1.bf16.msra.mxu0 0
        %891 = vmatprep.subr.bf16.mxu0 0
        %892 = vmatpush1.bf16.msra.mxu0 0
        %893 = vmatprep.subr.bf16.mxu0 0
        %894 = vmatpush1.bf16.msra.mxu0 0
        %895 = vmatprep.subr.bf16.mxu0 0
        %896 = vmatpush1.bf16.msra.mxu0 %v879
        %897 = vmatprep.subr.bf16.mxu0 0
        %898 = vmatpush2.bf16.msra.mxu0 0
        %899 = vmatprep.subr.bf16.mxu0 0
        %900 = vmatpush2.bf16.msra.mxu0 0
        %901 = vmatprep.subr.bf16.mxu0 0
        %902 = vmatpush2.bf16.msra.mxu0 0
        %903 = vmatprep.subr.bf16.mxu0 0
        %904 = vmatpush2.bf16.msra.mxu0 0
        %905 = vmatprep.subr.bf16.mxu0 0
        %906 = vmatpush2.bf16.msra.mxu0 0
        %907 = vmatprep.subr.bf16.mxu0 0
        %908 = vmatpush2.bf16.msra.mxu0 0
        %909 = vmatprep.subr.bf16.mxu0 0
        %910 = vmatpush2.bf16.msra.mxu0 0
        %911 = vmatprep.subr.bf16.mxu0 0
        %912 = vmatpush2.bf16.msra.mxu0 0
        %913 = vmatprep.mubr.bf16.mxu0 0
        %914 = vmatmul.mubr.bf16.gmra.mxu0 %v875
        %v915 = vpop.f32.mrf.mxu0
        %v916 = vadd.f32 0.0, %v915
        %v917 = vpop.f32.mrf.mxu0
        %v918 = vpop.f32.mrf.mxu0
        %v919 = vpop.f32.mrf.mxu0
        %920 = vdwg.mxu0
        %v921 = vadd.f32 %v867, %v916
        %922 = vst.msk [vmem:[#allocation6] sm:$0xff] %vm785, %v921
        %923 = vst.msk [vmem:[#allocation4] sm:$0xff] %vm859, %v841
        %v925 = vunpack.c.l.b16 %v779
        %v926 = vpack.c.b16 %v925, %v925
        %927 = vrot.lane.b32.xlu0 %v926, 120
        %v928 = vpop.permute.xlu0 %927
        %929 = vrot.lane.b32.xlu0 %v871, 120
        %v930 = vpop.permute.xlu0 %929
        %v932 = vsel %vm785, %v928, 0
        %v935 = vsel %vm785, %v930, 0
        %937 = vmatprep.subr.bf16.mxu0 0
        %938 = vmatpush1.bf16.xpose.msra.mxu0 0
        %939 = vmatprep.subr.bf16.mxu0 0
        %940 = vmatpush1.bf16.xpose.msra.mxu0 0
        %941 = vmatprep.subr.bf16.mxu0 0
        %942 = vmatpush1.bf16.xpose.msra.mxu0 0
        %943 = vmatprep.subr.bf16.mxu0 0
        %944 = vmatpush1.bf16.xpose.msra.mxu0 0
        %945 = vmatprep.subr.bf16.mxu0 0
        %946 = vmatpush1.bf16.xpose.msra.mxu0 0
        %947 = vmatprep.subr.bf16.mxu0 0
        %948 = vmatpush1.bf16.xpose.msra.mxu0 0
        %949 = vmatprep.subr.bf16.mxu0 0
        %950 = vmatpush1.bf16.xpose.msra.mxu0 0
        %951 = vmatprep.subr.bf16.mxu0 0
        %952 = vmatpush1.bf16.xpose.msra.mxu0 %v935
        %953 = vmatprep.subr.bf16.mxu0 0
        %954 = vmatpush2.bf16.xpose.msra.mxu0 0
        %955 = vmatprep.subr.bf16.mxu0 0
        %956 = vmatpush2.bf16.xpose.msra.mxu0 0
        %957 = vmatprep.subr.bf16.mxu0 0
        %958 = vmatpush2.bf16.xpose.msra.mxu0 0
        %959 = vmatprep.subr.bf16.mxu0 0
        %960 = vmatpush2.bf16.xpose.msra.mxu0 0
        %961 = vmatprep.subr.bf16.mxu0 0
        %962 = vmatpush2.bf16.xpose.msra.mxu0 0
        %963 = vmatprep.subr.bf16.mxu0 0
        %964 = vmatpush2.bf16.xpose.msra.mxu0 0
        %965 = vmatprep.subr.bf16.mxu0 0
        %966 = vmatpush2.bf16.xpose.msra.mxu0 0
        %967 = vmatprep.subr.bf16.mxu0 0
        %968 = vmatpush2.bf16.xpose.msra.mxu0 0
        %969 = vmatprep.mubr.bf16.mxu0 0
        %970 = vmatmul.mubr.bf16.gmra.mxu0 %v932
        %v971 = vpop.f32.mrf.mxu0
        %v972 = vadd.f32 0.0, %v971
        %v973 = vpop.f32.mrf.mxu0
        %v974 = vpop.f32.mrf.mxu0
        %v975 = vpop.f32.mrf.mxu0
        %976 = vdwg.mxu0
        %v977 = vmul.f32 %v972, 0.35355338
        %v978 = vsel %vm835, %v977, -1e+09
        %s979 = scalar_lea.vmem [#allocation4], 8
        %v980 = vld [vmem:[%s979] sm:$0xff]
        %v981 = vsel %vm785, %v978, -inf
        %982 = vmax.xlane.f32.xlu0 %v981
        %v983 = vpop.xlane.xlu0 %982
        %v984 = vmax.f32 %v980, %v983
        %v985 = vsub.f32 %v980, %v984
        %v986 = vmul.f32 %v985, 1.442695
        %v987 = vpow.pop %v986
        %989 = vset.pattern.permute.xlu0 0
        %990 = vperm.xlu0 %989, %v984
        %v991 = vpop.permute.xlu0 %990
        %v993 = vsub.f32 %v978, %v991
        %v994 = vmul.f32 %v993, 1.442695
        %v995 = vpow.pop %v994
        %s996 = scalar_lea.vmem [#allocation5], 8
        %v997 = vld [vmem:[%s996] sm:$0xff]
        %v998 = vmul.f32 %v987, %v997
        %v999 = vsel %vm785, %v995, 0.0
        %1000 = vadd.xlane.f32.xlu0 %v999
        %v1001 = vpop.xlane.xlu0 %1000
        %v1002 = vadd.f32 %v998, %v1001
        %1003 = vst.msk [vmem:[%s996] sm:$0xff] %vm859, %v1002
        %s1004 = scalar_lea.vmem [#allocation6], 8
        %v1005 = vld [vmem:[%s1004] sm:$0xff]
        %1007 = vset.pattern.permute.xlu0 0
        %1008 = vperm.xlu0 %1007, %v987
        %v1009 = vpop.permute.xlu0 %1008
        %v1011 = vmul.f32 %v1009, %v1005
        %v1012 = vpack.c.bf16 %v995, %v995
        %1013 = vrot.lane.b32.xlu0 %v871, 88
        %v1014 = vpop.permute.xlu0 %1013
        %v1016 = vsel %vm785, %v1012, 0
        %v1019 = vsel %vm877, %v1014, 0
        %1021 = vmatprep.subr.bf16.mxu0 0
        %1022 = vmatpush1.bf16.msra.mxu0 0
        %1023 = vmatprep.subr.bf16.mxu0 0
        %1024 = vmatpush1.bf16.msra.mxu0 0
        %1025 = vmatprep.subr.bf16.mxu0 0
        %1026 = vmatpush1.bf16.msra.mxu0 0
        %1027 = vmatprep.subr.bf16.mxu0 0
        %1028 = vmatpush1.bf16.msra.mxu0 0
        %1029 = vmatprep.subr.bf16.mxu0 0
        %1030 = vmatpush1.bf16.msra.mxu0 0
        %1031 = vmatprep.subr.bf16.mxu0 0
        %1032 = vmatpush1.bf16.msra.mxu0 0
        %1033 = vmatprep.subr.bf16.mxu0 0
        %1034 = vmatpush1.bf16.msra.mxu0 0
        %1035 = vmatprep.subr.bf16.mxu0 0
        %1036 = vmatpush1.bf16.msra.mxu0 %v1019
        %1037 = vmatprep.subr.bf16.mxu0 0
        %1038 = vmatpush2.bf16.msra.mxu0 0
        %1039 = vmatprep.subr.bf16.mxu0 0
        %1040 = vmatpush2.bf16.msra.mxu0 0
        %1041 = vmatprep.subr.bf16.mxu0 0
        %1042 = vmatpush2.bf16.msra.mxu0 0
        %1043 = vmatprep.subr.bf16.mxu0 0
        %1044 = vmatpush2.bf16.msra.mxu0 0
        %1045 = vmatprep.subr.bf16.mxu0 0
        %1046 = vmatpush2.bf16.msra.mxu0 0
        %1047 = vmatprep.subr.bf16.mxu0 0
        %1048 = vmatpush2.bf16.msra.mxu0 0
        %1049 = vmatprep.subr.bf16.mxu0 0
        %1050 = vmatpush2.bf16.msra.mxu0 0
        %1051 = vmatprep.subr.bf16.mxu0 0
        %1052 = vmatpush2.bf16.msra.mxu0 0
        %1053 = vmatprep.mubr.bf16.mxu0 0
        %1054 = vmatmul.mubr.bf16.gmra.mxu0 %v1016
        %v1055 = vpop.f32.mrf.mxu0
        %v1056 = vadd.f32 0.0, %v1055
        %v1057 = vpop.f32.mrf.mxu0
        %v1058 = vpop.f32.mrf.mxu0
        %v1059 = vpop.f32.mrf.mxu0
        %1060 = vdwg.mxu0
        %v1061 = vadd.f32 %v1011, %v1056
        %1062 = vst.msk [vmem:[%s1004] sm:$0xff] %vm785, %v1061
        %1063 = vst.msk [vmem:[%s979] sm:$0xff] %vm859, %v984
        %1064 = vrot.lane.b32.xlu0 %v926, 112
        %v1065 = vpop.permute.xlu0 %1064
        %1066 = vrot.lane.b32.xlu0 %v871, 112
        %v1067 = vpop.permute.xlu0 %1066
        %v1069 = vsel %vm785, %v1065, 0
        %v1072 = vsel %vm785, %v1067, 0
        %1074 = vmatprep.subr.bf16.mxu0 0
        %1075 = vmatpush1.bf16.xpose.msra.mxu0 0
        %1076 = vmatprep.subr.bf16.mxu0 0
        %1077 = vmatpush1.bf16.xpose.msra.mxu0 0
        %1078 = vmatprep.subr.bf16.mxu0 0
        %1079 = vmatpush1.bf16.xpose.msra.mxu0 0
        %1080 = vmatprep.subr.bf16.mxu0 0
        %1081 = vmatpush1.bf16.xpose.msra.mxu0 0
        %1082 = vmatprep.subr.bf16.mxu0 0
        %1083 = vmatpush1.bf16.xpose.msra.mxu0 0
        %1084 = vmatprep.subr.bf16.mxu0 0
        %1085 = vmatpush1.bf16.xpose.msra.mxu0 0
        %1086 = vmatprep.subr.bf16.mxu0 0
        %1087 = vmatpush1.bf16.xpose.msra.mxu0 0
        %1088 = vmatprep.subr.bf16.mxu0 0
        %1089 = vmatpush1.bf16.xpose.msra.mxu0 %v1072
        %1090 = vmatprep.subr.bf16.mxu0 0
        %1091 = vmatpush2.bf16.xpose.msra.mxu0 0
        %1092 = vmatprep.subr.bf16.mxu0 0
        %1093 = vmatpush2.bf16.xpose.msra.mxu0 0
        %1094 = vmatprep.subr.bf16.mxu0 0
        %1095 = vmatpush2.bf16.xpose.msra.mxu0 0
        %1096 = vmatprep.subr.bf16.mxu0 0
        %1097 = vmatpush2.bf16.xpose.msra.mxu0 0
        %1098 = vmatprep.subr.bf16.mxu0 0
        %1099 = vmatpush2.bf16.xpose.msra.mxu0 0
        %1100 = vmatprep.subr.bf16.mxu0 0
        %1101 = vmatpush2.bf16.xpose.msra.mxu0 0
        %1102 = vmatprep.subr.bf16.mxu0 0
        %1103 = vmatpush2.bf16.xpose.msra.mxu0 0
        %1104 = vmatprep.subr.bf16.mxu0 0
        %1105 = vmatpush2.bf16.xpose.msra.mxu0 0
        %1106 = vmatprep.mubr.bf16.mxu0 0
        %1107 = vmatmul.mubr.bf16.gmra.mxu0 %v1069
        %v1108 = vpop.f32.mrf.mxu0
        %v1109 = vadd.f32 0.0, %v1108
        %v1110 = vpop.f32.mrf.mxu0
        %v1111 = vpop.f32.mrf.mxu0
        %v1112 = vpop.f32.mrf.mxu0
        %1113 = vdwg.mxu0
        %v1114 = vmul.f32 %v1109, 0.35355338
        %v1115 = vsel %vm835, %v1114, -1e+09
        %s1116 = scalar_lea.vmem [#allocation4], 16
        %v1117 = vld [vmem:[%s1116] sm:$0xff]
        %v1118 = vsel %vm785, %v1115, -inf
        %1119 = vmax.xlane.f32.xlu0 %v1118
        %v1120 = vpop.xlane.xlu0 %1119
        %v1121 = vmax.f32 %v1117, %v1120
        %v1122 = vsub.f32 %v1117, %v1121
        %v1123 = vmul.f32 %v1122, 1.442695
        %v1124 = vpow.pop %v1123
        %1126 = vset.pattern.permute.xlu0 0
        %1127 = vperm.xlu0 %1126, %v1121
        %v1128 = vpop.permute.xlu0 %1127
        %v1130 = vsub.f32 %v1115, %v1128
        %v1131 = vmul.f32 %v1130, 1.442695
        %v1132 = vpow.pop %v1131
        %s1133 = scalar_lea.vmem [#allocation5], 16
        %v1134 = vld [vmem:[%s1133] sm:$0xff]
        %v1135 = vmul.f32 %v1124, %v1134
        %v1136 = vsel %vm785, %v1132, 0.0
        %1137 = vadd.xlane.f32.xlu0 %v1136
        %v1138 = vpop.xlane.xlu0 %1137
        %v1139 = vadd.f32 %v1135, %v1138
        %1140 = vst.msk [vmem:[%s1133] sm:$0xff] %vm859, %v1139
        %s1141 = scalar_lea.vmem [#allocation6], 16
        %v1142 = vld [vmem:[%s1141] sm:$0xff]
        %1144 = vset.pattern.permute.xlu0 0
        %1145 = vperm.xlu0 %1144, %v1124
        %v1146 = vpop.permute.xlu0 %1145
        %v1148 = vmul.f32 %v1146, %v1142
        %v1149 = vpack.c.bf16 %v1132, %v1132
        %1150 = vrot.lane.b32.xlu0 %v871, 80
        %v1151 = vpop.permute.xlu0 %1150
        %v1153 = vsel %vm785, %v1149, 0
        %v1156 = vsel %vm877, %v1151, 0
        %1158 = vmatprep.subr.bf16.mxu0 0
        %1159 = vmatpush1.bf16.msra.mxu0 0
        %1160 = vmatprep.subr.bf16.mxu0 0
        %1161 = vmatpush1.bf16.msra.mxu0 0
        %1162 = vmatprep.subr.bf16.mxu0 0
        %1163 = vmatpush1.bf16.msra.mxu0 0
        %1164 = vmatprep.subr.bf16.mxu0 0
        %1165 = vmatpush1.bf16.msra.mxu0 0
        %1166 = vmatprep.subr.bf16.mxu0 0
        %1167 = vmatpush1.bf16.msra.mxu0 0
        %1168 = vmatprep.subr.bf16.mxu0 0
        %1169 = vmatpush1.bf16.msra.mxu0 0
        %1170 = vmatprep.subr.bf16.mxu0 0
        %1171 = vmatpush1.bf16.msra.mxu0 0
        %1172 = vmatprep.subr.bf16.mxu0 0
        %1173 = vmatpush1.bf16.msra.mxu0 %v1156
        %1174 = vmatprep.subr.bf16.mxu0 0
        %1175 = vmatpush2.bf16.msra.mxu0 0
        %1176 = vmatprep.subr.bf16.mxu0 0
        %1177 = vmatpush2.bf16.msra.mxu0 0
        %1178 = vmatprep.subr.bf16.mxu0 0
        %1179 = vmatpush2.bf16.msra.mxu0 0
        %1180 = vmatprep.subr.bf16.mxu0 0
        %1181 = vmatpush2.bf16.msra.mxu0 0
        %1182 = vmatprep.subr.bf16.mxu0 0
        %1183 = vmatpush2.bf16.msra.mxu0 0
        %1184 = vmatprep.subr.bf16.mxu0 0
        %1185 = vmatpush2.bf16.msra.mxu0 0
        %1186 = vmatprep.subr.bf16.mxu0 0
        %1187 = vmatpush2.bf16.msra.mxu0 0
        %1188 = vmatprep.subr.bf16.mxu0 0
        %1189 = vmatpush2.bf16.msra.mxu0 0
        %1190 = vmatprep.mubr.bf16.mxu0 0
        %1191 = vmatmul.mubr.bf16.gmra.mxu0 %v1153
        %v1192 = vpop.f32.mrf.mxu0
        %v1193 = vadd.f32 0.0, %v1192
        %v1194 = vpop.f32.mrf.mxu0
        %v1195 = vpop.f32.mrf.mxu0
        %v1196 = vpop.f32.mrf.mxu0
        %1197 = vdwg.mxu0
        %v1198 = vadd.f32 %v1148, %v1193
        %1199 = vst.msk [vmem:[%s1141] sm:$0xff] %vm785, %v1198
        %1200 = vst.msk [vmem:[%s1116] sm:$0xff] %vm859, %v1121
        %1201 = vrot.lane.b32.xlu0 %v926, 104
        %v1202 = vpop.permute.xlu0 %1201
        %1203 = vrot.lane.b32.xlu0 %v871, 104
        %v1204 = vpop.permute.xlu0 %1203
        %v1206 = vsel %vm785, %v1202, 0
        %v1209 = vsel %vm785, %v1204, 0
        %1211 = vmatprep.subr.bf16.mxu0 0
        %1212 = vmatpush1.bf16.xpose.msra.mxu0 0
        %1213 = vmatprep.subr.bf16.mxu0 0
        %1214 = vmatpush1.bf16.xpose.msra.mxu0 0
        %1215 = vmatprep.subr.bf16.mxu0 0
        %1216 = vmatpush1.bf16.xpose.msra.mxu0 0
        %1217 = vmatprep.subr.bf16.mxu0 0
        %1218 = vmatpush1.bf16.xpose.msra.mxu0 0
        %1219 = vmatprep.subr.bf16.mxu0 0
        %1220 = vmatpush1.bf16.xpose.msra.mxu0 0
        %1221 = vmatprep.subr.bf16.mxu0 0
        %1222 = vmatpush1.bf16.xpose.msra.mxu0 0
        %1223 = vmatprep.subr.bf16.mxu0 0
        %1224 = vmatpush1.bf16.xpose.msra.mxu0 0
        %1225 = vmatprep.subr.bf16.mxu0 0
        %1226 = vmatpush1.bf16.xpose.msra.mxu0 %v1209
        %1227 = vmatprep.subr.bf16.mxu0 0
        %1228 = vmatpush2.bf16.xpose.msra.mxu0 0
        %1229 = vmatprep.subr.bf16.mxu0 0
        %1230 = vmatpush2.bf16.xpose.msra.mxu0 0
        %1231 = vmatprep.subr.bf16.mxu0 0
        %1232 = vmatpush2.bf16.xpose.msra.mxu0 0
        %1233 = vmatprep.subr.bf16.mxu0 0
        %1234 = vmatpush2.bf16.xpose.msra.mxu0 0
        %1235 = vmatprep.subr.bf16.mxu0 0
        %1236 = vmatpush2.bf16.xpose.msra.mxu0 0
        %1237 = vmatprep.subr.bf16.mxu0 0
        %1238 = vmatpush2.bf16.xpose.msra.mxu0 0
        %1239 = vmatprep.subr.bf16.mxu0 0
        %1240 = vmatpush2.bf16.xpose.msra.mxu0 0
        %1241 = vmatprep.subr.bf16.mxu0 0
        %1242 = vmatpush2.bf16.xpose.msra.mxu0 0
        %1243 = vmatprep.mubr.bf16.mxu0 0
        %1244 = vmatmul.mubr.bf16.gmra.mxu0 %v1206
        %v1245 = vpop.f32.mrf.mxu0
        %v1246 = vadd.f32 0.0, %v1245
        %v1247 = vpop.f32.mrf.mxu0
        %v1248 = vpop.f32.mrf.mxu0
        %v1249 = vpop.f32.mrf.mxu0
        %1250 = vdwg.mxu0
        %v1251 = vmul.f32 %v1246, 0.35355338
        %v1252 = vsel %vm835, %v1251, -1e+09
        %s1253 = scalar_lea.vmem [#allocation4], 24
        %v1254 = vld [vmem:[%s1253] sm:$0xff]
        %v1255 = vsel %vm785, %v1252, -inf
        %1256 = vmax.xlane.f32.xlu0 %v1255
        %v1257 = vpop.xlane.xlu0 %1256
        %v1258 = vmax.f32 %v1254, %v1257
        %v1259 = vsub.f32 %v1254, %v1258
        %v1260 = vmul.f32 %v1259, 1.442695
        %v1261 = vpow.pop %v1260
        %1263 = vset.pattern.permute.xlu0 0
        %1264 = vperm.xlu0 %1263, %v1258
        %v1265 = vpop.permute.xlu0 %1264
        %v1267 = vsub.f32 %v1252, %v1265
        %v1268 = vmul.f32 %v1267, 1.442695
        %v1269 = vpow.pop %v1268
        %s1270 = scalar_lea.vmem [#allocation5], 24
        %v1271 = vld [vmem:[%s1270] sm:$0xff]
        %v1272 = vmul.f32 %v1261, %v1271
        %v1273 = vsel %vm785, %v1269, 0.0
        %1274 = vadd.xlane.f32.xlu0 %v1273
        %v1275 = vpop.xlane.xlu0 %1274
        %v1276 = vadd.f32 %v1272, %v1275
        %1277 = vst.msk [vmem:[%s1270] sm:$0xff] %vm859, %v1276
        %s1278 = scalar_lea.vmem [#allocation6], 24
        %v1279 = vld [vmem:[%s1278] sm:$0xff]
        %1281 = vset.pattern.permute.xlu0 0
        %1282 = vperm.xlu0 %1281, %v1261
        %v1283 = vpop.permute.xlu0 %1282
        %v1285 = vmul.f32 %v1283, %v1279
        %v1286 = vpack.c.bf16 %v1269, %v1269
        %1287 = vrot.lane.b32.xlu0 %v871, 72
        %v1288 = vpop.permute.xlu0 %1287
        %v1290 = vsel %vm785, %v1286, 0
        %v1293 = vsel %vm877, %v1288, 0
        %1295 = vmatprep.subr.bf16.mxu0 0
        %1296 = vmatpush1.bf16.msra.mxu0 0
        %1297 = vmatprep.subr.bf16.mxu0 0
        %1298 = vmatpush1.bf16.msra.mxu0 0
        %1299 = vmatprep.subr.bf16.mxu0 0
        %1300 = vmatpush1.bf16.msra.mxu0 0
        %1301 = vmatprep.subr.bf16.mxu0 0
        %1302 = vmatpush1.bf16.msra.mxu0 0
        %1303 = vmatprep.subr.bf16.mxu0 0
        %1304 = vmatpush1.bf16.msra.mxu0 0
        %1305 = vmatprep.subr.bf16.mxu0 0
        %1306 = vmatpush1.bf16.msra.mxu0 0
        %1307 = vmatprep.subr.bf16.mxu0 0
        %1308 = vmatpush1.bf16.msra.mxu0 0
        %1309 = vmatprep.subr.bf16.mxu0 0
        %1310 = vmatpush1.bf16.msra.mxu0 %v1293
        %1311 = vmatprep.subr.bf16.mxu0 0
        %1312 = vmatpush2.bf16.msra.mxu0 0
        %1313 = vmatprep.subr.bf16.mxu0 0
        %1314 = vmatpush2.bf16.msra.mxu0 0
        %1315 = vmatprep.subr.bf16.mxu0 0
        %1316 = vmatpush2.bf16.msra.mxu0 0
        %1317 = vmatprep.subr.bf16.mxu0 0
        %1318 = vmatpush2.bf16.msra.mxu0 0
        %1319 = vmatprep.subr.bf16.mxu0 0
        %1320 = vmatpush2.bf16.msra.mxu0 0
        %1321 = vmatprep.subr.bf16.mxu0 0
        %1322 = vmatpush2.bf16.msra.mxu0 0
        %1323 = vmatprep.subr.bf16.mxu0 0
        %1324 = vmatpush2.bf16.msra.mxu0 0
        %1325 = vmatprep.subr.bf16.mxu0 0
        %1326 = vmatpush2.bf16.msra.mxu0 0
        %1327 = vmatprep.mubr.bf16.mxu0 0
        %1328 = vmatmul.mubr.bf16.gmra.mxu0 %v1290
        %v1329 = vpop.f32.mrf.mxu0
        %v1330 = vadd.f32 0.0, %v1329
        %v1331 = vpop.f32.mrf.mxu0
        %v1332 = vpop.f32.mrf.mxu0
        %v1333 = vpop.f32.mrf.mxu0
        %1334 = vdwg.mxu0
        %v1335 = vadd.f32 %v1285, %v1330
        %1336 = vst.msk [vmem:[%s1278] sm:$0xff] %vm785, %v1335
        %1337 = vst.msk [vmem:[%s1253] sm:$0xff] %vm859, %v1258
        // Predicated region
        $region93: #{tpu_custom_call.1} parent=63 // pred_check
          %p1338 = pneg %p659
        $region94: #{tpu_custom_call.1} parent=63 // pred_check_branch
          %1340 = sbr.rel (%p1338) target = $region96
        $region95: #{tpu_custom_call.1} parent=63 // pred_region
          %v1341 = vld [vmem:[#allocation5] sm:$0xff]
          %v1342 = vrcp.pop %v1341
          %v1343 = vld [vmem:[#allocation6] sm:$0xff]
          %1345 = vset.pattern.permute.xlu0 0
          %1346 = vperm.xlu0 %1345, %v1342
          %v1347 = vpop.permute.xlu0 %1346
          %v1349 = vmul.f32 %v1343, %v1347
          %1350 = vst.msk [vmem:[#allocation7] sm:$0xff] %vm785, %v1349
          %v1351 = vld [vmem:[%s996] sm:$0xff]
          %v1352 = vrcp.pop %v1351
          %v1353 = vld [vmem:[%s1004] sm:$0xff]
          %1355 = vset.pattern.permute.xlu0 0
          %1356 = vperm.xlu0 %1355, %v1352
          %v1357 = vpop.permute.xlu0 %1356
          %v1359 = vmul.f32 %v1353, %v1357
          %1361 = vrot.lane.b32.xlu0 %v1359, 8
          %v1362 = vpop.permute.xlu0 %1361
          %vm1364 = vcmask 130112
          %1365 = vst.msk [vmem:[#allocation7] sm:$0xff] %vm1364, %v1362
          %v1366 = vld [vmem:[%s1133] sm:$0xff]
          %v1367 = vrcp.pop %v1366
          %v1368 = vld [vmem:[%s1141] sm:$0xff]
          %1370 = vset.pattern.permute.xlu0 0
          %1371 = vperm.xlu0 %1370, %v1367
          %v1372 = vpop.permute.xlu0 %1371
          %v1374 = vmul.f32 %v1368, %v1372
          %1376 = vrot.lane.b32.xlu0 %v1374, 16
          %v1377 = vpop.permute.xlu0 %1376
          %vm1379 = vcmask 195712
          %1380 = vst.msk [vmem:[#allocation7] sm:$0xff] %vm1379, %v1377
          %v1381 = vld [vmem:[%s1270] sm:$0xff]
          %v1382 = vrcp.pop %v1381
          %v1383 = vld [vmem:[%s1278] sm:$0xff]
          %1385 = vset.pattern.permute.xlu0 0
          %1386 = vperm.xlu0 %1385, %v1382
          %v1387 = vpop.permute.xlu0 %1386
          %v1389 = vmul.f32 %v1383, %v1387
          %1391 = vrot.lane.b32.xlu0 %v1389, 24
          %v1392 = vpop.permute.xlu0 %1391
          %vm1394 = vcmask 261312
          %1395 = vst.msk [vmem:[#allocation7] sm:$0xff] %vm1394, %v1392
          %v1396 = vld [vmem:[#allocation7] sm:$0xff]
          %v1397 = vpack.c.bf16 %v1396, %v1396
          %v1398 = vld [vmem:[#allocation16] sm:$0xf]
          %v1399 = vld [vmem:[#allocation16 + $0x4] sm:$0xf]
          %v1400 = vld [vmem:[#allocation16 + $0x8] sm:$0xf]
          %v1401 = vld [vmem:[#allocation16 + $0xc] sm:$0xf]
          %v1402 = vld [vmem:[%s9] sm:$0x1]
          %v1404 = vlaneseq
          %v1405 = vshrl.u32 %v1404, 7
          %v1406 = vsub.s32 0, %v1405
          %v1407 = vrot.slane %v1402, %v1406
          %v1413 = vunpack.c.l.b16 %v1398
          %v1414 = vunpack.c.l.b16 %v1399
          %v1415 = vunpack.c.l.b16 %v1400
          %v1416 = vunpack.c.l.b16 %v1401
          %v1417 = vpack.c.b16 %v1414, %v1413
          %v1418 = vpack.c.b16 %v1416, %v1415
          %vm1421 = vcmask 261120
          %v1423 = vsel %vm1421, %v1397, 0
          %1425 = vmatprep.subr.bf16.mxu0 0
          %1426 = vmatpush1.bf16.msra.mxu0 0
          %1427 = vmatprep.subr.bf16.mxu0 0
          %1428 = vmatpush1.bf16.msra.mxu0 0
          %1429 = vmatprep.subr.bf16.mxu0 0
          %1430 = vmatpush1.bf16.msra.mxu0 0
          %1431 = vmatprep.subr.bf16.mxu0 0
          %1432 = vmatpush1.bf16.msra.mxu0 0
          %1433 = vmatprep.subr.bf16.mxu0 0
          %1434 = vmatpush1.bf16.msra.mxu0 0
          %1435 = vmatprep.subr.bf16.mxu0 0
          %1436 = vmatpush1.bf16.msra.mxu0 0
          %1437 = vmatprep.subr.bf16.mxu0 0
          %1438 = vmatpush1.bf16.msra.mxu0 %v1418
          %1439 = vmatprep.subr.bf16.mxu0 0
          %1440 = vmatpush1.bf16.msra.mxu0 %v1417
          %1441 = vmatprep.subr.bf16.mxu0 0
          %1442 = vmatpush2.bf16.msra.mxu0 0
          %1443 = vmatprep.subr.bf16.mxu0 0
          %1444 = vmatpush2.bf16.msra.mxu0 0
          %1445 = vmatprep.subr.bf16.mxu0 0
          %1446 = vmatpush2.bf16.msra.mxu0 0
          %1447 = vmatprep.subr.bf16.mxu0 0
          %1448 = vmatpush2.bf16.msra.mxu0 0
          %1449 = vmatprep.subr.bf16.mxu0 0
          %1450 = vmatpush2.bf16.msra.mxu0 0
          %1451 = vmatprep.subr.bf16.mxu0 0
          %1452 = vmatpush2.bf16.msra.mxu0 0
          %1453 = vmatprep.subr.bf16.mxu0 0
          %1454 = vmatpush2.bf16.msra.mxu0 0
          %1455 = vmatprep.subr.bf16.mxu0 0
          %1456 = vmatpush2.bf16.msra.mxu0 0
          %1457 = vmatprep.mubr.bf16.mxu0 0
          %1458 = vmatmul.mubr.bf16.gmra.mxu0 %v1423
          %v1459 = vpop.f32.mrf.mxu0
          %v1460 = vadd.f32 %v1407, %v1459
          %v1461 = vpop.f32.mrf.mxu0
          %v1462 = vpop.f32.mrf.mxu0
          %v1463 = vpop.f32.mrf.mxu0
          %1464 = vdwg.mxu0
          %v1465 = vld [vmem:[%s463] sm:$0xff]
          %v1466 = vadd.f32 %v1465, %v1460
          %1467 = vst.msk [vmem:[%s537] sm:$0xff] %vm1421, %v1466
        $region96: #{tpu_custom_call.1} parent=63 // pred_fallthru
          _
        %s1468 = sand.u32 %s315, 1
        %s1469 = scalar_lea.sflag [#allocation10], %s1468
        %s1470 = sand.u32 %s315, 1
        %s1471 = smul.addr %s1470, 8
        %s1472 = scalar_lea.vmem [#allocation17], %s1471
        // Predicated region
        $region97: #{tpu_custom_call.1} parent=63 // pred_check
          %p1473 = pneg %p325
        $region98: #{tpu_custom_call.1} parent=63 // pred_check_branch
          %1475 = sbr.rel (%p1473) target = $region100
        $region99: #{tpu_custom_call.1} parent=63 // pred_region
          %s1477 = ssub.s32 128, 128
          %1478 = vsyncadd %s1469, %s1477
          %s1479 = sadd.s32 %s38, %s37
          %s1480 = smul.addr %s1479, 128
          %s1481 = scalar_lea.hbm %s11, %s1480
          %s1483 = sshll.u32 %s1472, 4
          %s1484 = int_to_ptr.vmem [resolvable:$true] %s1483
          %1486 = dma.vmem_to_hbm [thread:$0]  %s1484, 128, %s1481, %s1469
        $region100: #{tpu_custom_call.1} parent=63 // pred_fallthru
          _
      $region64: #{tpu_custom_call.1} parent=5 // pred_fallthru
        _
      %p1487 = scmp.le.s32.totalorder 2, %s27
      // Predicated region
      $region101: #{tpu_custom_call.1} parent=5 // pred_check
        %p1488 = pneg %p1487
      $region102: #{tpu_custom_call.1} parent=5 // pred_check_branch
        %1490 = sbr.rel (%p1488) target = $region104
      $region103: #{tpu_custom_call.1} parent=5 // pred_region
        %s1491 = ssub.s32 %s27, 2
        // Predicated region
        $region105: #{tpu_custom_call.1} parent=103 // pred_check
          %p1492 = pneg %p331
        $region106: #{tpu_custom_call.1} parent=103 // pred_check_branch
          %1494 = sbr.rel (%p1492) target = $region108
        $region107: #{tpu_custom_call.1} parent=103 // pred_region
          %s1495 = sand.u32 %s316, 1
          %s1496 = scalar_lea.sflag [#allocation10], %s1495
          %s1497 = sand.u32 %s316, 1
          %s1498 = smul.addr %s1497, 8
          %s1499 = scalar_lea.vmem [#allocation17], %s1498
          %1500 = dma.done %s1496, 128
        $region108: #{tpu_custom_call.1} parent=103 // pred_fallthru
          _
      $region104: #{tpu_custom_call.1} parent=5 // pred_fallthru
        _
    $region6: #{tpu_custom_call.1} parent=1 // loop_footer
      %s31 = sadd.s32 1, %s27
    $region7: #{tpu_custom_call.1} parent=1 // loop_footer_branch
      %26 = sbr.rel target = $region3
    $region8: #{tpu_custom_call.1} parent=1 // loop_exit
      _
    %1501 = vsyncpa [#allocation9], 1
    %s1502 = scalar_lea.sflag [#allocation9], 1
    %1503 = vsyncpa %s1502, 1
    %1504 = vsyncpa [#allocation12], 1
    %s1505 = scalar_lea.sflag [#allocation12], 1
    %1506 = vsyncpa %s1505, 1
    %1507 = vsyncpa [#allocation15], 1
    %1508 = vsyncpa [#allocation10], 1
    %s1509 = scalar_lea.sflag [#allocation10], 1
    %1510 = vsyncpa %s1509, 1

</llo_original>
